<compile_context>
chip_gen: v7x
topology: tpu7x:2x2x1
jax: 0.10.0
libtpu: 0.0.40
codegen_flags: <defaults>
</compile_context>

<pallas_src>
import jax
import jax.numpy as jnp
from jax.experimental import pallas as pl
from jax.experimental.pallas import tpu as pltpu


def _convblock_kernel(x_ref, w1_ref, s1_ref, b1_ref, w2_ref, s2_ref, b2_ref,
                      o_ref):
    """One grid step: Nb batch elements, full spatial extent (pooled Hp x Wp)."""
    Nb, Hp, _, Wp, C2 = x_ref.shape
    Cin = C2 // 2
    Cmid = w1_ref.shape[2]
    Cout = w2_ref.shape[2]
    cdt = x_ref.dtype                 # bf16 compute dtype for MXU operands
    M = Nb * Hp * Wp                  # MXU M dimension (all pixels in the block)

    # ---- MaxPool2d(kernel=2, stride=2), fused (single HBM read of the input) ----
    # x_ref layout: (Nb, Hp, 2, Wp, 2*Cin); last dim = [w-even channels | w-odd channels].
    xb = x_ref[...]
    v = jnp.maximum(xb[:, :, 0], xb[:, :, 1])            # max over the two rows
    pooled = jnp.maximum(v[..., :Cin], v[..., Cin:])     # max over the two cols -> (Nb,Hp,Wp,Cin)

    def conv3x3_bn_relu(inp, w_ref, s_ref, b_ref):
        # inp: (Nb, Hp, Wp, cin) in compute dtype; w_ref: (3, 3*cin, cout).
        cin = w_ref.shape[1] // 3
        # Zero-pad H and W by 1 as values (no scratch, no zero-fill store passes;
        # also keeps every grid step independent so "parallel" is safe).
        zc = jnp.zeros((Nb, Hp, 1, cin), cdt)
        zr = jnp.zeros((Nb, 1, Wp + 2, cin), cdt)
        p = jnp.concatenate([zc, inp, zc], axis=2)        # (Nb, Hp,   Wp+2, cin)
        p = jnp.concatenate([zr, p, zr], axis=1)          # (Nb, Hp+2, Wp+2, cin)
        acc = None
        # dx taps folded into the contraction: 3 matmuls with K = 3*cin.
        for dy in range(3):
            rows = p[:, dy:dy + Hp]                       # (Nb, Hp, Wp+2, cin)
            patch = jnp.concatenate(
                [rows[:, :, 0:Wp], rows[:, :, 1:Wp + 1], rows[:, :, 2:Wp + 2]],
                axis=-1)                                  # (Nb, Hp, Wp, 3*cin)
            part = jnp.dot(patch.reshape(M, 3 * cin), w_ref[dy],
                           preferred_element_type=jnp.float32)
            acc = part if acc is None else acc + part
        # Folded BatchNorm (per-channel scale/bias) + ReLU, in f32.
        return jnp.maximum(acc * s_ref[...] + b_ref[...], 0.0)      # (M, cout) f32

    h = conv3x3_bn_relu(pooled, w1_ref, s1_ref, b1_ref)
    h = h.reshape(Nb, Hp, Wp, Cmid).astype(cdt)
    out = conv3x3_bn_relu(h, w2_ref, s2_ref, b2_ref)
    # NOTE: for real UNet layers Cout >= 64..512, so the output last dim fills
    # lanes; at toy Cout the store is masked (acceptable here).
    o_ref[...] = out.reshape(Nb, Hp, Wp, Cout).astype(o_ref.dtype)


def conv_block_forward_nhwc(x_nhwc, params, *, compute_dtype=jnp.bfloat16):
    """ConvBlock forward, NHWC in/out: (N, H, W, Cin) -> (N, H//2, W//2, Cout)."""
    w1, s1, b1, w2, s2, b2 = params
    N, H, W, Cin = x_nhwc.shape
    if H % 2 or W % 2:
        raise ValueError("MaxPool2d(2): H and W must be even.")
    Hp, Wp = H // 2, W // 2
    Cmid, Cout = w1.shape[3], w2.shape[3]

    # Free row-major reshape exposing the 2x2 pool taps (no strided loads, no
    # extra HBM copy): (N, H, W, C) -> (N, Hp, 2, Wp, 2*C).
    x5 = x_nhwc.astype(compute_dtype).reshape(N, Hp, 2, Wp, 2 * Cin)

    # Fold the kx (dx) taps into the matmul K dim: HWIO (3,3,ci,co) -> (3, 3*ci, co).
    w1f = w1.astype(compute_dtype).reshape(3, 3 * Cin, Cmid)
    w2f = w2.astype(compute_dtype).reshape(3, 3 * Cmid, Cout)
    s1_ = s1.reshape(1, Cmid).astype(jnp.float32)
    b1_ = b1.reshape(1, Cmid).astype(jnp.float32)
    s2_ = s2.reshape(1, Cout).astype(jnp.float32)
    b2_ = b2.reshape(1, Cout).astype(jnp.float32)

    # Batch-block so the per-matmul M (= nb*Hp*Wp) is reasonably full; nb | N.
    nb = max(1, 512 // max(1, Hp * Wp))
    nb = min(nb, N)
    while N % nb:
        nb -= 1
    grid = (N // nb,)

    def full_spec(shape):
        zeros = (0,) * len(shape)
        return pl.BlockSpec(shape, lambda n, _z=zeros: _z)

    # Rough VMEM footprint; only raise the scoped limit (default 32 MiB) when a
    # large layer would actually need it (bind on v6e).  Capped well under v7x's
    # 64 MiB physical VMEM.
    elem = jnp.dtype(compute_dtype).itemsize
    est = nb * Hp * Wp * (2 * Cin * elem * 2            # double-buffered input block
                          + Cout * 4 * 2                # double-buffered f32 output
                          + 4 * (Cin + Cmid + Cout))    # in-kernel f32 temporaries
    vmem_limit = None if est < (24 << 20) else min(56 << 20, int(2 * est))

    out = pl.pallas_call(
        _convblock_kernel,
        out_shape=jax.ShapeDtypeStruct((N, Hp, Wp, Cout), jnp.float32),
        grid=grid,
        in_specs=[pl.BlockSpec((nb, Hp, 2, Wp, 2 * Cin),
                               lambda n: (n, 0, 0, 0, 0)),
                  full_spec(w1f.shape), full_spec(s1_.shape), full_spec(b1_.shape),
                  full_spec(w2f.shape), full_spec(s2_.shape), full_spec(b2_.shape)],
        out_specs=pl.BlockSpec((nb, Hp, Wp, Cout), lambda n: (n, 0, 0, 0)),
        compiler_params=pltpu.CompilerParams(
            dimension_semantics=("parallel",),          # batch blocks are independent
            vmem_limit_bytes=vmem_limit),
    )(x5, w1f, s1_, b1_, w2f, s2_, b2_)
    return out


def conv_block_forward(x_nchw, params):
    """PyTorch-layout wrapper: (N, Cin, H, W) -> (N, Cout, H//2, W//2).

    For UNet-style chains, prefer conv_block_forward_nhwc and keep activations
    NHWC end-to-end to avoid these two full-tensor HBM transposes.
    """
    x = jnp.transpose(x_nchw, (0, 2, 3, 1))
    o = conv_block_forward_nhwc(x, params)
    return jnp.transpose(o, (0, 3, 1, 2))


def init_params(key, in_channels, out_channels):
    """Deterministic parameters. BN (eval mode) + conv bias folded to scale/bias."""
    mid = out_channels
    eps = 1e-5
    ks = jax.random.split(key, 12)

    def conv_w(k, cin, cout):
        bound = 1.0 / jnp.sqrt(jnp.float32(cin * 9))
        return jax.random.uniform(k, (3, 3, cin, cout), jnp.float32, -bound, bound)

    def bn_fold(k0, k1, k2, k3, k4, c):
        conv_bias = 0.1 * jax.random.normal(k0, (c,), jnp.float32)
        gamma = 1.0 + 0.1 * jax.random.normal(k1, (c,), jnp.float32)
        beta = 0.1 * jax.random.normal(k2, (c,), jnp.float32)
        mean = 0.1 * jax.random.normal(k3, (c,), jnp.float32)
        var = 1.0 + 0.1 * jnp.abs(jax.random.normal(k4, (c,), jnp.float32))
        scale = gamma / jnp.sqrt(var + eps)
        bias = beta + scale * (conv_bias - mean)
        return scale, bias

    w1 = conv_w(ks[0], in_channels, mid)
    s1, b1 = bn_fold(ks[1], ks[2], ks[3], ks[4], ks[5], mid)
    w2 = conv_w(ks[6], mid, out_channels)
    s2, b2 = bn_fold(ks[7], ks[8], ks[9], ks[10], ks[11], out_channels)
    return (w1, s1, b1, w2, s2, b2)


def _ref_forward(x_nchw, params, *, compute_dtype=jnp.bfloat16):
    """Pure-JAX (XLA) reference using the same bf16-operand / f32-accum recipe."""
    w1, s1, b1, w2, s2, b2 = params
    dn = ('NHWC', 'HWIO', 'NHWC')
    x = jnp.transpose(x_nchw, (0, 2, 3, 1)).astype(compute_dtype)
    pooled = jax.lax.reduce_window(x.astype(jnp.float32), -jnp.inf, jax.lax.max,
                                   (1, 2, 2, 1), (1, 2, 2, 1), 'VALID')
    pooled = pooled.astype(compute_dtype)
    h = jax.lax.conv_general_dilated(
        pooled, w1.astype(compute_dtype), (1, 1), 'SAME',
        dimension_numbers=jax.lax.conv_dimension_numbers(pooled.shape, w1.shape, dn),
        preferred_element_type=jnp.float32)
    h = jnp.maximum(h * s1 + b1, 0.0).astype(compute_dtype)
    o = jax.lax.conv_general_dilated(
        h, w2.astype(compute_dtype), (1, 1), 'SAME',
        dimension_numbers=jax.lax.conv_dimension_numbers(h.shape, w2.shape, dn),
        preferred_element_type=jnp.float32)
    o = jnp.maximum(o * s2 + b2, 0.0)
    return jnp.transpose(o, (0, 3, 1, 2))


if __name__ == "__main__":
    key = jax.random.PRNGKey(0)
    kx, kp = jax.random.split(key)

    N, Cin, H, W = 2, 4, 16, 16
    Cout = 8
    x = jax.random.normal(kx, (N, Cin, H, W), jnp.float32)
    params = init_params(kp, Cin, Cout)

    out = jax.block_until_ready(conv_block_forward(x, params))
    ref = jax.block_until_ready(_ref_forward(x, params))

    assert out.shape == (N, Cout, H // 2, W // 2), out.shape
    max_err = float(jnp.max(jnp.abs(out - ref)))
    assert jnp.allclose(out, ref, atol=2e-3, rtol=2e-3), max_err

    print("KERNEL_OK")
</pallas_src>

<mosaic_0001>
module attributes {stable_mosaic.version = 11 : i64} {
  func.func @_convblock_kernel(%arg0: i32, %arg1: memref<2x8x2x8x8xbf16, #tpu.memory_space<vmem>>, %arg2: memref<3x12x8xbf16, #tpu.memory_space<vmem>>, %arg3: memref<1x8xf32, #tpu.memory_space<vmem>>, %arg4: memref<1x8xf32, #tpu.memory_space<vmem>>, %arg5: memref<3x24x8xbf16, #tpu.memory_space<vmem>>, %arg6: memref<1x8xf32, #tpu.memory_space<vmem>>, %arg7: memref<1x8xf32, #tpu.memory_space<vmem>>, %arg8: memref<2x8x8x8xf32, #tpu.memory_space<vmem>>) attributes {dimension_semantics = [#tpu.dimension_semantics<parallel>], iteration_bounds = array<i64: 1>, scalar_prefetch = 0 : i64, scratch_operands = 0 : i64, tpu.core_type = #tpu.core_type<tc>, window_params = [{transform_indices = @transform_0, window_bounds = array<i64: 2, 8, 2, 8, 8>}, {pipeline_mode = #tpu.pipeline_mode<synchronous>, transform_indices = @transform_1, window_bounds = array<i64: 3, 12, 8>}, {pipeline_mode = #tpu.pipeline_mode<synchronous>, transform_indices = @transform_2, window_bounds = array<i64: 1, 8>}, {pipeline_mode = #tpu.pipeline_mode<synchronous>, transform_indices = @transform_3, window_bounds = array<i64: 1, 8>}, {pipeline_mode = #tpu.pipeline_mode<synchronous>, transform_indices = @transform_4, window_bounds = array<i64: 3, 24, 8>}, {pipeline_mode = #tpu.pipeline_mode<synchronous>, transform_indices = @transform_5, window_bounds = array<i64: 1, 8>}, {pipeline_mode = #tpu.pipeline_mode<synchronous>, transform_indices = @transform_6, window_bounds = array<i64: 1, 8>}, {transform_indices = @transform_7, window_bounds = array<i64: 2, 8, 8, 8>}]} {
    %c0 = arith.constant 0 : index
    %c0_0 = arith.constant 0 : index
    %c0_1 = arith.constant 0 : index
    %c0_2 = arith.constant 0 : index
    %c0_3 = arith.constant 0 : index
    %0 = vector.load %arg1[%c0, %c0_0, %c0_1, %c0_2, %c0_3] : memref<2x8x2x8x8xbf16, #tpu.memory_space<vmem>>, vector<2x8x2x8x8xbf16>
    %1 = vector.extract_strided_slice %0 {offsets = [0, 0, 0, 0, 0], sizes = [2, 8, 1, 8, 8], strides = [1, 1, 1, 1, 1]} : vector<2x8x2x8x8xbf16> to vector<2x8x1x8x8xbf16>
    %2 = vector.shape_cast %1 : vector<2x8x1x8x8xbf16> to vector<2x8x8x8xbf16>
    %3 = vector.extract_strided_slice %0 {offsets = [0, 0, 1, 0, 0], sizes = [2, 8, 1, 8, 8], strides = [1, 1, 1, 1, 1]} : vector<2x8x2x8x8xbf16> to vector<2x8x1x8x8xbf16>
    %4 = vector.shape_cast %3 : vector<2x8x1x8x8xbf16> to vector<2x8x8x8xbf16>
    %5 = arith.maximumf %2, %4 : vector<2x8x8x8xbf16>
    %6 = vector.extract_strided_slice %5 {offsets = [0, 0, 0, 0], sizes = [2, 8, 8, 4], strides = [1, 1, 1, 1]} : vector<2x8x8x8xbf16> to vector<2x8x8x4xbf16>
    %7 = vector.extract_strided_slice %5 {offsets = [0, 0, 0, 4], sizes = [2, 8, 8, 4], strides = [1, 1, 1, 1]} : vector<2x8x8x8xbf16> to vector<2x8x8x4xbf16>
    %8 = arith.maximumf %6, %7 : vector<2x8x8x4xbf16>
    %cst = arith.constant 0.000000e+00 : bf16
    %9 = vector.broadcast %cst : bf16 to vector<2x8x1x4xbf16>
    %cst_4 = arith.constant 0.000000e+00 : bf16
    %10 = vector.broadcast %cst_4 : bf16 to vector<2x1x10x4xbf16>
    %11 = tpu.concatenate %9, %8, %9 in 2 : vector<2x8x1x4xbf16>, vector<2x8x8x4xbf16>, vector<2x8x1x4xbf16> -> vector<2x8x10x4xbf16>
    %12 = tpu.concatenate %10, %11, %10 in 1 : vector<2x1x10x4xbf16>, vector<2x8x10x4xbf16>, vector<2x1x10x4xbf16> -> vector<2x10x10x4xbf16>
    %13 = vector.extract_strided_slice %12 {offsets = [0, 0, 0, 0], sizes = [2, 8, 10, 4], strides = [1, 1, 1, 1]} : vector<2x10x10x4xbf16> to vector<2x8x10x4xbf16>
    %14 = vector.extract_strided_slice %13 {offsets = [0, 0, 0, 0], sizes = [2, 8, 8, 4], strides = [1, 1, 1, 1]} : vector<2x8x10x4xbf16> to vector<2x8x8x4xbf16>
    %15 = vector.extract_strided_slice %13 {offsets = [0, 0, 1, 0], sizes = [2, 8, 8, 4], strides = [1, 1, 1, 1]} : vector<2x8x10x4xbf16> to vector<2x8x8x4xbf16>
    %16 = vector.extract_strided_slice %13 {offsets = [0, 0, 2, 0], sizes = [2, 8, 8, 4], strides = [1, 1, 1, 1]} : vector<2x8x10x4xbf16> to vector<2x8x8x4xbf16>
    %17 = tpu.concatenate %14, %15, %16 in 3 : vector<2x8x8x4xbf16>, vector<2x8x8x4xbf16>, vector<2x8x8x4xbf16> -> vector<2x8x8x12xbf16>
    %18 = vector.shape_cast %17 : vector<2x8x8x12xbf16> to vector<128x12xbf16>
    %c0_5 = arith.constant 0 : index
    %c0_6 = arith.constant 0 : index
    %c0_7 = arith.constant 0 : index
    %19 = vector.load %arg2[%c0_5, %c0_6, %c0_7] : memref<3x12x8xbf16, #tpu.memory_space<vmem>>, vector<1x12x8xbf16>
    %20 = vector.shape_cast %19 : vector<1x12x8xbf16> to vector<12x8xbf16>
    %cst_8 = arith.constant dense<0.000000e+00> : vector<128x8xf32>
    %21 = tpu.matmul %18, %20, %cst_8 {dimension_numbers = #tpu.dot_dimension_numbers<[1], [0], [0], [1], [0, 0, 1, 1], [], []>} : vector<128x12xbf16>, vector<12x8xbf16>, vector<128x8xf32> -> vector<128x8xf32>
    %22 = vector.extract_strided_slice %12 {offsets = [0, 1, 0, 0], sizes = [2, 8, 10, 4], strides = [1, 1, 1, 1]} : vector<2x10x10x4xbf16> to vector<2x8x10x4xbf16>
    %23 = vector.extract_strided_slice %22 {offsets = [0, 0, 0, 0], sizes = [2, 8, 8, 4], strides = [1, 1, 1, 1]} : vector<2x8x10x4xbf16> to vector<2x8x8x4xbf16>
    %24 = vector.extract_strided_slice %22 {offsets = [0, 0, 1, 0], sizes = [2, 8, 8, 4], strides = [1, 1, 1, 1]} : vector<2x8x10x4xbf16> to vector<2x8x8x4xbf16>
    %25 = vector.extract_strided_slice %22 {offsets = [0, 0, 2, 0], sizes = [2, 8, 8, 4], strides = [1, 1, 1, 1]} : vector<2x8x10x4xbf16> to vector<2x8x8x4xbf16>
    %26 = tpu.concatenate %23, %24, %25 in 3 : vector<2x8x8x4xbf16>, vector<2x8x8x4xbf16>, vector<2x8x8x4xbf16> -> vector<2x8x8x12xbf16>
    %27 = vector.shape_cast %26 : vector<2x8x8x12xbf16> to vector<128x12xbf16>
    %c1 = arith.constant 1 : index
    %c0_9 = arith.constant 0 : index
    %c0_10 = arith.constant 0 : index
    %28 = vector.load %arg2[%c1, %c0_9, %c0_10] : memref<3x12x8xbf16, #tpu.memory_space<vmem>>, vector<1x12x8xbf16>
    %29 = vector.shape_cast %28 : vector<1x12x8xbf16> to vector<12x8xbf16>
    %cst_11 = arith.constant dense<0.000000e+00> : vector<128x8xf32>
    %30 = tpu.matmul %27, %29, %cst_11 {dimension_numbers = #tpu.dot_dimension_numbers<[1], [0], [0], [1], [0, 0, 1, 1], [], []>} : vector<128x12xbf16>, vector<12x8xbf16>, vector<128x8xf32> -> vector<128x8xf32>
    %31 = arith.addf %21, %30 : vector<128x8xf32>
    %32 = vector.extract_strided_slice %12 {offsets = [0, 2, 0, 0], sizes = [2, 8, 10, 4], strides = [1, 1, 1, 1]} : vector<2x10x10x4xbf16> to vector<2x8x10x4xbf16>
    %33 = vector.extract_strided_slice %32 {offsets = [0, 0, 0, 0], sizes = [2, 8, 8, 4], strides = [1, 1, 1, 1]} : vector<2x8x10x4xbf16> to vector<2x8x8x4xbf16>
    %34 = vector.extract_strided_slice %32 {offsets = [0, 0, 1, 0], sizes = [2, 8, 8, 4], strides = [1, 1, 1, 1]} : vector<2x8x10x4xbf16> to vector<2x8x8x4xbf16>
    %35 = vector.extract_strided_slice %32 {offsets = [0, 0, 2, 0], sizes = [2, 8, 8, 4], strides = [1, 1, 1, 1]} : vector<2x8x10x4xbf16> to vector<2x8x8x4xbf16>
    %36 = tpu.concatenate %33, %34, %35 in 3 : vector<2x8x8x4xbf16>, vector<2x8x8x4xbf16>, vector<2x8x8x4xbf16> -> vector<2x8x8x12xbf16>
    %37 = vector.shape_cast %36 : vector<2x8x8x12xbf16> to vector<128x12xbf16>
    %c2 = arith.constant 2 : index
    %c0_12 = arith.constant 0 : index
    %c0_13 = arith.constant 0 : index
    %38 = vector.load %arg2[%c2, %c0_12, %c0_13] : memref<3x12x8xbf16, #tpu.memory_space<vmem>>, vector<1x12x8xbf16>
    %39 = vector.shape_cast %38 : vector<1x12x8xbf16> to vector<12x8xbf16>
    %cst_14 = arith.constant dense<0.000000e+00> : vector<128x8xf32>
    %40 = tpu.matmul %37, %39, %cst_14 {dimension_numbers = #tpu.dot_dimension_numbers<[1], [0], [0], [1], [0, 0, 1, 1], [], []>} : vector<128x12xbf16>, vector<12x8xbf16>, vector<128x8xf32> -> vector<128x8xf32>
    %41 = arith.addf %31, %40 : vector<128x8xf32>
    %c0_15 = arith.constant 0 : index
    %c0_16 = arith.constant 0 : index
    %42 = vector.load %arg3[%c0_15, %c0_16] : memref<1x8xf32, #tpu.memory_space<vmem>>, vector<1x8xf32>
    %43 = vector.broadcast %42 : vector<1x8xf32> to vector<128x8xf32>
    %44 = arith.mulf %41, %43 : vector<128x8xf32>
    %c0_17 = arith.constant 0 : index
    %c0_18 = arith.constant 0 : index
    %45 = vector.load %arg4[%c0_17, %c0_18] : memref<1x8xf32, #tpu.memory_space<vmem>>, vector<1x8xf32>
    %46 = vector.broadcast %45 : vector<1x8xf32> to vector<128x8xf32>
    %47 = arith.addf %44, %46 : vector<128x8xf32>
    %cst_19 = arith.constant 0.000000e+00 : f32
    %48 = vector.broadcast %cst_19 : f32 to vector<128x8xf32>
    %49 = arith.maximumf %47, %48 : vector<128x8xf32>
    %50 = vector.shape_cast %49 : vector<128x8xf32> to vector<2x8x8x8xf32>
    %51 = arith.truncf %50 : vector<2x8x8x8xf32> to vector<2x8x8x8xbf16>
    %cst_20 = arith.constant 0.000000e+00 : bf16
    %52 = vector.broadcast %cst_20 : bf16 to vector<2x8x1x8xbf16>
    %cst_21 = arith.constant 0.000000e+00 : bf16
    %53 = vector.broadcast %cst_21 : bf16 to vector<2x1x10x8xbf16>
    %54 = tpu.concatenate %52, %51, %52 in 2 : vector<2x8x1x8xbf16>, vector<2x8x8x8xbf16>, vector<2x8x1x8xbf16> -> vector<2x8x10x8xbf16>
    %55 = tpu.concatenate %53, %54, %53 in 1 : vector<2x1x10x8xbf16>, vector<2x8x10x8xbf16>, vector<2x1x10x8xbf16> -> vector<2x10x10x8xbf16>
    %56 = vector.extract_strided_slice %55 {offsets = [0, 0, 0, 0], sizes = [2, 8, 10, 8], strides = [1, 1, 1, 1]} : vector<2x10x10x8xbf16> to vector<2x8x10x8xbf16>
    %57 = vector.extract_strided_slice %56 {offsets = [0, 0, 0, 0], sizes = [2, 8, 8, 8], strides = [1, 1, 1, 1]} : vector<2x8x10x8xbf16> to vector<2x8x8x8xbf16>
    %58 = vector.extract_strided_slice %56 {offsets = [0, 0, 1, 0], sizes = [2, 8, 8, 8], strides = [1, 1, 1, 1]} : vector<2x8x10x8xbf16> to vector<2x8x8x8xbf16>
    %59 = vector.extract_strided_slice %56 {offsets = [0, 0, 2, 0], sizes = [2, 8, 8, 8], strides = [1, 1, 1, 1]} : vector<2x8x10x8xbf16> to vector<2x8x8x8xbf16>
    %60 = tpu.concatenate %57, %58, %59 in 3 : vector<2x8x8x8xbf16>, vector<2x8x8x8xbf16>, vector<2x8x8x8xbf16> -> vector<2x8x8x24xbf16>
    %61 = vector.shape_cast %60 : vector<2x8x8x24xbf16> to vector<128x24xbf16>
    %c0_22 = arith.constant 0 : index
    %c0_23 = arith.constant 0 : index
    %c0_24 = arith.constant 0 : index
    %62 = vector.load %arg5[%c0_22, %c0_23, %c0_24] : memref<3x24x8xbf16, #tpu.memory_space<vmem>>, vector<1x24x8xbf16>
    %63 = vector.shape_cast %62 : vector<1x24x8xbf16> to vector<24x8xbf16>
    %cst_25 = arith.constant dense<0.000000e+00> : vector<128x8xf32>
    %64 = tpu.matmul %61, %63, %cst_25 {dimension_numbers = #tpu.dot_dimension_numbers<[1], [0], [0], [1], [0, 0, 1, 1], [], []>} : vector<128x24xbf16>, vector<24x8xbf16>, vector<128x8xf32> -> vector<128x8xf32>
    %65 = vector.extract_strided_slice %55 {offsets = [0, 1, 0, 0], sizes = [2, 8, 10, 8], strides = [1, 1, 1, 1]} : vector<2x10x10x8xbf16> to vector<2x8x10x8xbf16>
    %66 = vector.extract_strided_slice %65 {offsets = [0, 0, 0, 0], sizes = [2, 8, 8, 8], strides = [1, 1, 1, 1]} : vector<2x8x10x8xbf16> to vector<2x8x8x8xbf16>
    %67 = vector.extract_strided_slice %65 {offsets = [0, 0, 1, 0], sizes = [2, 8, 8, 8], strides = [1, 1, 1, 1]} : vector<2x8x10x8xbf16> to vector<2x8x8x8xbf16>
    %68 = vector.extract_strided_slice %65 {offsets = [0, 0, 2, 0], sizes = [2, 8, 8, 8], strides = [1, 1, 1, 1]} : vector<2x8x10x8xbf16> to vector<2x8x8x8xbf16>
    %69 = tpu.concatenate %66, %67, %68 in 3 : vector<2x8x8x8xbf16>, vector<2x8x8x8xbf16>, vector<2x8x8x8xbf16> -> vector<2x8x8x24xbf16>
    %70 = vector.shape_cast %69 : vector<2x8x8x24xbf16> to vector<128x24xbf16>
    %c1_26 = arith.constant 1 : index
    %c0_27 = arith.constant 0 : index
    %c0_28 = arith.constant 0 : index
    %71 = vector.load %arg5[%c1_26, %c0_27, %c0_28] : memref<3x24x8xbf16, #tpu.memory_space<vmem>>, vector<1x24x8xbf16>
    %72 = vector.shape_cast %71 : vector<1x24x8xbf16> to vector<24x8xbf16>
    %cst_29 = arith.constant dense<0.000000e+00> : vector<128x8xf32>
    %73 = tpu.matmul %70, %72, %cst_29 {dimension_numbers = #tpu.dot_dimension_numbers<[1], [0], [0], [1], [0, 0, 1, 1], [], []>} : vector<128x24xbf16>, vector<24x8xbf16>, vector<128x8xf32> -> vector<128x8xf32>
    %74 = arith.addf %64, %73 : vector<128x8xf32>
    %75 = vector.extract_strided_slice %55 {offsets = [0, 2, 0, 0], sizes = [2, 8, 10, 8], strides = [1, 1, 1, 1]} : vector<2x10x10x8xbf16> to vector<2x8x10x8xbf16>
    %76 = vector.extract_strided_slice %75 {offsets = [0, 0, 0, 0], sizes = [2, 8, 8, 8], strides = [1, 1, 1, 1]} : vector<2x8x10x8xbf16> to vector<2x8x8x8xbf16>
    %77 = vector.extract_strided_slice %75 {offsets = [0, 0, 1, 0], sizes = [2, 8, 8, 8], strides = [1, 1, 1, 1]} : vector<2x8x10x8xbf16> to vector<2x8x8x8xbf16>
    %78 = vector.extract_strided_slice %75 {offsets = [0, 0, 2, 0], sizes = [2, 8, 8, 8], strides = [1, 1, 1, 1]} : vector<2x8x10x8xbf16> to vector<2x8x8x8xbf16>
    %79 = tpu.concatenate %76, %77, %78 in 3 : vector<2x8x8x8xbf16>, vector<2x8x8x8xbf16>, vector<2x8x8x8xbf16> -> vector<2x8x8x24xbf16>
    %80 = vector.shape_cast %79 : vector<2x8x8x24xbf16> to vector<128x24xbf16>
    %c2_30 = arith.constant 2 : index
    %c0_31 = arith.constant 0 : index
    %c0_32 = arith.constant 0 : index
    %81 = vector.load %arg5[%c2_30, %c0_31, %c0_32] : memref<3x24x8xbf16, #tpu.memory_space<vmem>>, vector<1x24x8xbf16>
    %82 = vector.shape_cast %81 : vector<1x24x8xbf16> to vector<24x8xbf16>
    %cst_33 = arith.constant dense<0.000000e+00> : vector<128x8xf32>
    %83 = tpu.matmul %80, %82, %cst_33 {dimension_numbers = #tpu.dot_dimension_numbers<[1], [0], [0], [1], [0, 0, 1, 1], [], []>} : vector<128x24xbf16>, vector<24x8xbf16>, vector<128x8xf32> -> vector<128x8xf32>
    %84 = arith.addf %74, %83 : vector<128x8xf32>
    %c0_34 = arith.constant 0 : index
    %c0_35 = arith.constant 0 : index
    %85 = vector.load %arg6[%c0_34, %c0_35] : memref<1x8xf32, #tpu.memory_space<vmem>>, vector<1x8xf32>
    %86 = vector.broadcast %85 : vector<1x8xf32> to vector<128x8xf32>
    %87 = arith.mulf %84, %86 : vector<128x8xf32>
    %c0_36 = arith.constant 0 : index
    %c0_37 = arith.constant 0 : index
    %88 = vector.load %arg7[%c0_36, %c0_37] : memref<1x8xf32, #tpu.memory_space<vmem>>, vector<1x8xf32>
    %89 = vector.broadcast %88 : vector<1x8xf32> to vector<128x8xf32>
    %90 = arith.addf %87, %89 : vector<128x8xf32>
    %cst_38 = arith.constant 0.000000e+00 : f32
    %91 = vector.broadcast %cst_38 : f32 to vector<128x8xf32>
    %92 = arith.maximumf %90, %91 : vector<128x8xf32>
    %93 = vector.shape_cast %92 : vector<128x8xf32> to vector<2x8x8x8xf32>
    %c0_39 = arith.constant 0 : index
    %c0_40 = arith.constant 0 : index
    %c0_41 = arith.constant 0 : index
    %c0_42 = arith.constant 0 : index
    %94 = vector.load %arg8[%c0_39, %c0_40, %c0_41, %c0_42] : memref<2x8x8x8xf32, #tpu.memory_space<vmem>>, vector<2x8x8x8xf32>
    tpu.vector_store %arg8[%c0_39, %c0_40, %c0_41, %c0_42], %93 {strides = array<i32>} : memref<2x8x8x8xf32, #tpu.memory_space<vmem>>, vector<2x8x8x8xf32>,
    return
  }
  func.func @transform_0(%arg0: i32) -> (i32, i32, i32, i32, i32) {
    %c0_i32 = arith.constant 0 : i32
    %c0_i32_0 = arith.constant 0 : i32
    %c0_i32_1 = arith.constant 0 : i32
    %c0_i32_2 = arith.constant 0 : i32
    %c0_i32_3 = arith.constant 0 : i32
    return %arg0, %c0_i32, %c0_i32_0, %c0_i32_1, %c0_i32_2 : i32, i32, i32, i32, i32
  }
  func.func @transform_1(%arg0: i32) -> (i32, i32, i32) {
    %c0_i32 = arith.constant 0 : i32
    %c0_i32_0 = arith.constant 0 : i32
    %c0_i32_1 = arith.constant 0 : i32
    %c0_i32_2 = arith.constant 0 : i32
    return %c0_i32, %c0_i32_0, %c0_i32_1 : i32, i32, i32
  }
  func.func @transform_2(%arg0: i32) -> (i32, i32) {
    %c0_i32 = arith.constant 0 : i32
    %c0_i32_0 = arith.constant 0 : i32
    %c0_i32_1 = arith.constant 0 : i32
    return %c0_i32, %c0_i32_0 : i32, i32
  }
  func.func @transform_3(%arg0: i32) -> (i32, i32) {
    %c0_i32 = arith.constant 0 : i32
    %c0_i32_0 = arith.constant 0 : i32
    %c0_i32_1 = arith.constant 0 : i32
    return %c0_i32, %c0_i32_0 : i32, i32
  }
  func.func @transform_4(%arg0: i32) -> (i32, i32, i32) {
    %c0_i32 = arith.constant 0 : i32
    %c0_i32_0 = arith.constant 0 : i32
    %c0_i32_1 = arith.constant 0 : i32
    %c0_i32_2 = arith.constant 0 : i32
    return %c0_i32, %c0_i32_0, %c0_i32_1 : i32, i32, i32
  }
  func.func @transform_5(%arg0: i32) -> (i32, i32) {
    %c0_i32 = arith.constant 0 : i32
    %c0_i32_0 = arith.constant 0 : i32
    %c0_i32_1 = arith.constant 0 : i32
    return %c0_i32, %c0_i32_0 : i32, i32
  }
  func.func @transform_6(%arg0: i32) -> (i32, i32) {
    %c0_i32 = arith.constant 0 : i32
    %c0_i32_0 = arith.constant 0 : i32
    %c0_i32_1 = arith.constant 0 : i32
    return %c0_i32, %c0_i32_0 : i32, i32
  }
  func.func @transform_7(%arg0: i32) -> (i32, i32, i32, i32) {
    %c0_i32 = arith.constant 0 : i32
    %c0_i32_0 = arith.constant 0 : i32
    %c0_i32_1 = arith.constant 0 : i32
    %c0_i32_2 = arith.constant 0 : i32
    return %arg0, %c0_i32, %c0_i32_0, %c0_i32_1 : i32, i32, i32, i32
  }
}

</mosaic_0001>

<llo_original>
// kernel: tpu_custom_call.1
$region0: #{tpu_custom_call.1}
  #allocation0 [shape = 'u32[]', space=smem, size = 0x4, offset = 0x4, fixed_abs, tag = 'smem constant byte address 0x4 - core index']
  #allocation1 [shape = 'u32[144,128]{1,0:T(1,128)}', space=vmem, size = 0x12000, scoped, tag = 'internal scratch']
  %s0 = inlined_call_operand.hbm [shape: bf16[2,8,2,8,8], index: 0, kind: input, shape index: {}]
  %s1 = inlined_call_operand.vmem [shape: bf16[3,12,8], index: 1, kind: input, shape index: {}]
  %s2 = inlined_call_operand.vmem [shape: f32[1,8], index: 2, kind: input, shape index: {}]
  %s3 = inlined_call_operand.vmem [shape: f32[1,8], index: 3, kind: input, shape index: {}]
  %s4 = inlined_call_operand.vmem [shape: bf16[3,24,8], index: 4, kind: input, shape index: {}]
  %s5 = inlined_call_operand.vmem [shape: f32[1,8], index: 5, kind: input, shape index: {}]
  %s6 = inlined_call_operand.vmem [shape: f32[1,8], index: 6, kind: input, shape index: {}]
  %s7 = inlined_call_operand.hbm [shape: f32[2,8,8,8], index: 7, kind: output, shape index: {}]
  %s8 = sld [smem:[#allocation0]]
  $region42: #{tpu_custom_call.1} parent=0
    _
  %s10 = ssub.s32 1, %s8
  %s11 = scalar_select 0, %s10, %s8
  $region1: #{tpu_custom_call.1} parent=0
    #allocation2 [shape = 'u8[65536]{0}', space=vmem, size = 0x10000, scoped, tag = 'input window, operand 0, single buffered']
    #allocation3 [shape = 's32[1]{0}', space=sflag, size = 0x4, scoped, tag = 'scoped memory for tpu_custom_call.1']
    #allocation4 [shape = 's32[1]{0}', space=sflag, size = 0x4, scoped, tag = 'scoped memory for tpu_custom_call.1']
    #allocation5 [shape = 'u8[65536]{0}', space=vmem, size = 0x10000, scoped, tag = 'output window, operand 0, single buffered']
    %12 = vsyncpa [#allocation3], 0
    %13 = vsyncpa [#allocation4], 0
    // Predicated region
    $region2: #{tpu_custom_call.1} parent=1 // pred_check
      _
    $region3: #{tpu_custom_call.1} parent=1 // pred_check_branch
      %15 = sbr.rel (0) target = $region5
    $region4: #{tpu_custom_call.1} parent=1 // pred_region
      %s17 = ssub.s32 2048, 2048
      %18 = vsyncadd [#allocation3], %s17
      %s19 = sshll.u32 [#allocation2], 4
      %s20 = int_to_ptr.vmem [resolvable:$true] %s19
      %25 = dma.hbm_to_vmem [thread:$0]  %s0, 2048, %s20, [#allocation3], 64, 64, 4
    $region5: #{tpu_custom_call.1} parent=1 // pred_fallthru
      _
    // Predicated region
    $region6: #{tpu_custom_call.1} parent=1 // pred_check
      _
    $region7: #{tpu_custom_call.1} parent=1 // pred_check_branch
      %27 = sbr.rel (0) target = $region9
    $region8: #{tpu_custom_call.1} parent=1 // pred_region
      _
    $region9: #{tpu_custom_call.1} parent=1 // pred_fallthru
      _
    // Predicated region
    $region10: #{tpu_custom_call.1} parent=1 // pred_check
      _
    $region11: #{tpu_custom_call.1} parent=1 // pred_check_branch
      %29 = sbr.rel (0) target = $region13
    $region12: #{tpu_custom_call.1} parent=1 // pred_region
      _
    $region13: #{tpu_custom_call.1} parent=1 // pred_fallthru
      _
    // Predicated region
    $region14: #{tpu_custom_call.1} parent=1 // pred_check
      _
    $region15: #{tpu_custom_call.1} parent=1 // pred_check_branch
      %31 = sbr.rel (0) target = $region17
    $region16: #{tpu_custom_call.1} parent=1 // pred_region
      _
    $region17: #{tpu_custom_call.1} parent=1 // pred_fallthru
      _
    // Predicated region
    $region18: #{tpu_custom_call.1} parent=1 // pred_check
      _
    $region19: #{tpu_custom_call.1} parent=1 // pred_check_branch
      %33 = sbr.rel (0) target = $region21
    $region20: #{tpu_custom_call.1} parent=1 // pred_region
      _
    $region21: #{tpu_custom_call.1} parent=1 // pred_fallthru
      _
    // Predicated region
    $region22: #{tpu_custom_call.1} parent=1 // pred_check
      _
    $region23: #{tpu_custom_call.1} parent=1 // pred_check_branch
      %35 = sbr.rel (0) target = $region25
    $region24: #{tpu_custom_call.1} parent=1 // pred_region
      _
    $region25: #{tpu_custom_call.1} parent=1 // pred_fallthru
      _
    // Predicated region
    $region26: #{tpu_custom_call.1} parent=1 // pred_check
      _
    $region27: #{tpu_custom_call.1} parent=1 // pred_check_branch
      %37 = sbr.rel (0) target = $region29
    $region28: #{tpu_custom_call.1} parent=1 // pred_region
      _
    $region29: #{tpu_custom_call.1} parent=1 // pred_fallthru
      _
    // Predicated region
    $region30: #{tpu_custom_call.1} parent=1 // pred_check
      _
    $region31: #{tpu_custom_call.1} parent=1 // pred_check_branch
      %39 = sbr.rel (0) target = $region33
    $region32: #{tpu_custom_call.1} parent=1 // pred_region
      %40 = dma.done [#allocation3], 2048
    $region33: #{tpu_custom_call.1} parent=1 // pred_fallthru
      _
    %v42 = vld [vmem:[#allocation2] sm:$0xf]
    %v43 = vld [vmem:[#allocation2 + $0x4] sm:$0xf]
    %v44 = vld [vmem:[#allocation2 + $0x8] sm:$0xf]
    %v45 = vld [vmem:[#allocation2 + $0xc] sm:$0xf]
    %v46 = vld [vmem:[#allocation2 + $0x10] sm:$0xf]
    %v47 = vld [vmem:[#allocation2 + $0x14] sm:$0xf]
    %v48 = vld [vmem:[#allocation2 + $0x18] sm:$0xf]
    %v49 = vld [vmem:[#allocation2 + $0x1c] sm:$0xf]
    %v50 = vld [vmem:[#allocation2 + $0x20] sm:$0xf]
    %v51 = vld [vmem:[#allocation2 + $0x24] sm:$0xf]
    %v52 = vld [vmem:[#allocation2 + $0x28] sm:$0xf]
    %v53 = vld [vmem:[#allocation2 + $0x2c] sm:$0xf]
    %v54 = vld [vmem:[#allocation2 + $0x30] sm:$0xf]
    %v55 = vld [vmem:[#allocation2 + $0x34] sm:$0xf]
    %v56 = vld [vmem:[#allocation2 + $0x38] sm:$0xf]
    %v57 = vld [vmem:[#allocation2 + $0x3c] sm:$0xf]
    %v58 = vld [vmem:[#allocation2 + $0x40] sm:$0xf]
    %v59 = vld [vmem:[#allocation2 + $0x44] sm:$0xf]
    %v60 = vld [vmem:[#allocation2 + $0x48] sm:$0xf]
    %v61 = vld [vmem:[#allocation2 + $0x4c] sm:$0xf]
    %v62 = vld [vmem:[#allocation2 + $0x50] sm:$0xf]
    %v63 = vld [vmem:[#allocation2 + $0x54] sm:$0xf]
    %v64 = vld [vmem:[#allocation2 + $0x58] sm:$0xf]
    %v65 = vld [vmem:[#allocation2 + $0x5c] sm:$0xf]
    %v66 = vld [vmem:[#allocation2 + $0x60] sm:$0xf]
    %v67 = vld [vmem:[#allocation2 + $0x64] sm:$0xf]
    %v68 = vld [vmem:[#allocation2 + $0x68] sm:$0xf]
    %v69 = vld [vmem:[#allocation2 + $0x6c] sm:$0xf]
    %v70 = vld [vmem:[#allocation2 + $0x70] sm:$0xf]
    %v71 = vld [vmem:[#allocation2 + $0x74] sm:$0xf]
    %v72 = vld [vmem:[#allocation2 + $0x78] sm:$0xf]
    %v73 = vld [vmem:[#allocation2 + $0x7c] sm:$0xf]
    %v74 = vmax.bf16 %v42, %v43
    %v75 = vmax.bf16 %v44, %v45
    %v76 = vmax.bf16 %v46, %v47
    %v77 = vmax.bf16 %v48, %v49
    %v78 = vmax.bf16 %v50, %v51
    %v79 = vmax.bf16 %v52, %v53
    %v80 = vmax.bf16 %v54, %v55
    %v81 = vmax.bf16 %v56, %v57
    %v82 = vmax.bf16 %v58, %v59
    %v83 = vmax.bf16 %v60, %v61
    %v84 = vmax.bf16 %v62, %v63
    %v85 = vmax.bf16 %v64, %v65
    %v86 = vmax.bf16 %v66, %v67
    %v87 = vmax.bf16 %v68, %v69
    %v88 = vmax.bf16 %v70, %v71
    %v89 = vmax.bf16 %v72, %v73
    %106 = vrot.lane.b32.xlu0 %v74, 124
    %v107 = vpop.permute.xlu0 %106
    %108 = vrot.lane.b32.xlu0 %v75, 124
    %v109 = vpop.permute.xlu0 %108
    %110 = vrot.lane.b32.xlu0 %v76, 124
    %v111 = vpop.permute.xlu0 %110
    %112 = vrot.lane.b32.xlu0 %v77, 124
    %v113 = vpop.permute.xlu0 %112
    %114 = vrot.lane.b32.xlu0 %v78, 124
    %v115 = vpop.permute.xlu0 %114
    %116 = vrot.lane.b32.xlu0 %v79, 124
    %v117 = vpop.permute.xlu0 %116
    %118 = vrot.lane.b32.xlu0 %v80, 124
    %v119 = vpop.permute.xlu0 %118
    %120 = vrot.lane.b32.xlu0 %v81, 124
    %v121 = vpop.permute.xlu0 %120
    %122 = vrot.lane.b32.xlu0 %v82, 124
    %v123 = vpop.permute.xlu0 %122
    %124 = vrot.lane.b32.xlu0 %v83, 124
    %v125 = vpop.permute.xlu0 %124
    %126 = vrot.lane.b32.xlu0 %v84, 124
    %v127 = vpop.permute.xlu0 %126
    %128 = vrot.lane.b32.xlu0 %v85, 124
    %v129 = vpop.permute.xlu0 %128
    %130 = vrot.lane.b32.xlu0 %v86, 124
    %v131 = vpop.permute.xlu0 %130
    %132 = vrot.lane.b32.xlu0 %v87, 124
    %v133 = vpop.permute.xlu0 %132
    %134 = vrot.lane.b32.xlu0 %v88, 124
    %v135 = vpop.permute.xlu0 %134
    %136 = vrot.lane.b32.xlu0 %v89, 124
    %v137 = vpop.permute.xlu0 %136
    %v154 = vmax.bf16 %v74, %v107
    %v155 = vmax.bf16 %v75, %v109
    %v156 = vmax.bf16 %v76, %v111
    %v157 = vmax.bf16 %v77, %v113
    %v158 = vmax.bf16 %v78, %v115
    %v159 = vmax.bf16 %v79, %v117
    %v160 = vmax.bf16 %v80, %v119
    %v161 = vmax.bf16 %v81, %v121
    %v162 = vmax.bf16 %v82, %v123
    %v163 = vmax.bf16 %v83, %v125
    %v164 = vmax.bf16 %v84, %v127
    %v165 = vmax.bf16 %v85, %v129
    %v166 = vmax.bf16 %v86, %v131
    %v167 = vmax.bf16 %v87, %v133
    %v168 = vmax.bf16 %v88, %v135
    %v169 = vmax.bf16 %v89, %v137
    %v186 = vunpack.c.l.b16 %v154
    %v187 = vunpack.c.l.b16 %v155
    %v188 = vunpack.c.l.b16 %v156
    %v189 = vunpack.c.l.b16 %v157
    %v190 = vunpack.c.l.b16 %v158
    %v191 = vunpack.c.l.b16 %v159
    %v192 = vunpack.c.l.b16 %v160
    %v193 = vunpack.c.l.b16 %v161
    %v194 = vunpack.c.l.b16 %v162
    %v195 = vunpack.c.l.b16 %v163
    %v196 = vunpack.c.l.b16 %v164
    %v197 = vunpack.c.l.b16 %v165
    %v198 = vunpack.c.l.b16 %v166
    %v199 = vunpack.c.l.b16 %v167
    %v200 = vunpack.c.l.b16 %v168
    %v201 = vunpack.c.l.b16 %v169
    %v202 = vpack.c.b16 %v186, %v186
    %v203 = vpack.c.b16 %v187, %v187
    %v204 = vpack.c.b16 %v188, %v188
    %v205 = vpack.c.b16 %v189, %v189
    %v206 = vpack.c.b16 %v190, %v190
    %v207 = vpack.c.b16 %v191, %v191
    %v208 = vpack.c.b16 %v192, %v192
    %v209 = vpack.c.b16 %v193, %v193
    %v210 = vpack.c.b16 %v194, %v194
    %v211 = vpack.c.b16 %v195, %v195
    %v212 = vpack.c.b16 %v196, %v196
    %v213 = vpack.c.b16 %v197, %v197
    %v214 = vpack.c.b16 %v198, %v198
    %v215 = vpack.c.b16 %v199, %v199
    %v216 = vpack.c.b16 %v200, %v200
    %v217 = vpack.c.b16 %v201, %v201
    %v219 = vshrl.u32 %v202, 16
    %v221 = vrot.slane %v219, 7
    %v222 = vshll.u32 %v202, 16
    %v224 = vor.u32 %v221, %v222
    %v226 = vshrl.u32 %v203, 16
    %v228 = vrot.slane %v226, 7
    %v229 = vshll.u32 %v203, 16
    %v231 = vor.u32 %v228, %v229
    %v233 = vshrl.u32 %v204, 16
    %v235 = vrot.slane %v233, 7
    %v236 = vshll.u32 %v204, 16
    %v238 = vor.u32 %v235, %v236
    %v240 = vshrl.u32 %v205, 16
    %v242 = vrot.slane %v240, 7
    %v243 = vshll.u32 %v205, 16
    %v245 = vor.u32 %v242, %v243
    %v247 = vshrl.u32 %v206, 16
    %v249 = vrot.slane %v247, 7
    %v250 = vshll.u32 %v206, 16
    %v252 = vor.u32 %v249, %v250
    %v254 = vshrl.u32 %v207, 16
    %v256 = vrot.slane %v254, 7
    %v257 = vshll.u32 %v207, 16
    %v259 = vor.u32 %v256, %v257
    %v261 = vshrl.u32 %v208, 16
    %v263 = vrot.slane %v261, 7
    %v264 = vshll.u32 %v208, 16
    %v266 = vor.u32 %v263, %v264
    %v268 = vshrl.u32 %v209, 16
    %v270 = vrot.slane %v268, 7
    %v271 = vshll.u32 %v209, 16
    %v273 = vor.u32 %v270, %v271
    %v275 = vshrl.u32 %v210, 16
    %v277 = vrot.slane %v275, 7
    %v278 = vshll.u32 %v210, 16
    %v280 = vor.u32 %v277, %v278
    %v282 = vshrl.u32 %v211, 16
    %v284 = vrot.slane %v282, 7
    %v285 = vshll.u32 %v211, 16
    %v287 = vor.u32 %v284, %v285
    %v289 = vshrl.u32 %v212, 16
    %v291 = vrot.slane %v289, 7
    %v292 = vshll.u32 %v212, 16
    %v294 = vor.u32 %v291, %v292
    %v296 = vshrl.u32 %v213, 16
    %v298 = vrot.slane %v296, 7
    %v299 = vshll.u32 %v213, 16
    %v301 = vor.u32 %v298, %v299
    %v303 = vshrl.u32 %v214, 16
    %v305 = vrot.slane %v303, 7
    %v306 = vshll.u32 %v214, 16
    %v308 = vor.u32 %v305, %v306
    %v310 = vshrl.u32 %v215, 16
    %v312 = vrot.slane %v310, 7
    %v313 = vshll.u32 %v215, 16
    %v315 = vor.u32 %v312, %v313
    %v317 = vshrl.u32 %v216, 16
    %v319 = vrot.slane %v317, 7
    %v320 = vshll.u32 %v216, 16
    %v322 = vor.u32 %v319, %v320
    %v324 = vshrl.u32 %v217, 16
    %v326 = vrot.slane %v324, 7
    %v327 = vshll.u32 %v217, 16
    %v329 = vor.u32 %v326, %v327
    %vm346 = vcmask 1040384
    %vm347 = vsmask.f32 256
    %vm348 = vmand %vm346, %vm347
    %v349 = vsel %vm348, 0, %v224
    %v350 = vsel %vm348, 0, %v231
    %v351 = vsel %vm348, 0, %v238
    %v352 = vsel %vm348, 0, %v245
    %v353 = vsel %vm348, 0, %v252
    %v354 = vsel %vm348, 0, %v259
    %v355 = vsel %vm348, 0, %v266
    %v356 = vsel %vm348, 0, %v273
    %v357 = vsel %vm348, 0, %v280
    %v358 = vsel %vm348, 0, %v287
    %v359 = vsel %vm348, 0, %v294
    %v360 = vsel %vm348, 0, %v301
    %v361 = vsel %vm348, 0, %v308
    %v362 = vsel %vm348, 0, %v315
    %v363 = vsel %vm348, 0, %v322
    %v364 = vsel %vm348, 0, %v329
    %vm365 = vcmask 1044480
    %vm366 = vsmask.f32 4352
    %vm367 = vmand %vm365, %vm366
    %v368 = vsel %vm367, %v349, 0
    %v369 = vsel %vm367, %v350, 0
    %v370 = vsel %vm367, %v351, 0
    %v371 = vsel %vm367, %v352, 0
    %v372 = vsel %vm367, %v353, 0
    %v373 = vsel %vm367, %v354, 0
    %v374 = vsel %vm367, %v355, 0
    %v375 = vsel %vm367, %v356, 0
    %v376 = vsel %vm367, %v357, 0
    %v377 = vsel %vm367, %v358, 0
    %v378 = vsel %vm367, %v359, 0
    %v379 = vsel %vm367, %v360, 0
    %v380 = vsel %vm367, %v361, 0
    %v381 = vsel %vm367, %v362, 0
    %v382 = vsel %vm367, %v363, 0
    %v383 = vsel %vm367, %v364, 0
    %v385 = vshrl.u32 0, 16
    %v387 = vshll.u32 0, 16
    %v389 = vrot.slane %v387, 1
    %v390 = vor.u32 %v385, %v389
    %v392 = vshrl.u32 %v368, 16
    %v394 = vshll.u32 %v368, 16
    %v396 = vrot.slane %v394, 1
    %v397 = vor.u32 %v392, %v396
    %v399 = vshrl.u32 %v369, 16
    %v401 = vshll.u32 %v369, 16
    %v403 = vrot.slane %v401, 1
    %v404 = vor.u32 %v399, %v403
    %v406 = vshrl.u32 %v370, 16
    %v408 = vshll.u32 %v370, 16
    %v410 = vrot.slane %v408, 1
    %v411 = vor.u32 %v406, %v410
    %v413 = vshrl.u32 %v371, 16
    %v415 = vshll.u32 %v371, 16
    %v417 = vrot.slane %v415, 1
    %v418 = vor.u32 %v413, %v417
    %v420 = vshrl.u32 %v372, 16
    %v422 = vshll.u32 %v372, 16
    %v424 = vrot.slane %v422, 1
    %v425 = vor.u32 %v420, %v424
    %v427 = vshrl.u32 %v373, 16
    %v429 = vshll.u32 %v373, 16
    %v431 = vrot.slane %v429, 1
    %v432 = vor.u32 %v427, %v431
    %v434 = vshrl.u32 %v374, 16
    %v436 = vshll.u32 %v374, 16
    %v438 = vrot.slane %v436, 1
    %v439 = vor.u32 %v434, %v438
    %v441 = vshrl.u32 %v376, 16
    %v443 = vshll.u32 %v376, 16
    %v445 = vrot.slane %v443, 1
    %v446 = vor.u32 %v441, %v445
    %v448 = vshrl.u32 %v377, 16
    %v450 = vshll.u32 %v377, 16
    %v452 = vrot.slane %v450, 1
    %v453 = vor.u32 %v448, %v452
    %v455 = vshrl.u32 %v378, 16
    %v457 = vshll.u32 %v378, 16
    %v459 = vrot.slane %v457, 1
    %v460 = vor.u32 %v455, %v459
    %v462 = vshrl.u32 %v379, 16
    %v464 = vshll.u32 %v379, 16
    %v466 = vrot.slane %v464, 1
    %v467 = vor.u32 %v462, %v466
    %v469 = vshrl.u32 %v380, 16
    %v471 = vshll.u32 %v380, 16
    %v473 = vrot.slane %v471, 1
    %v474 = vor.u32 %v469, %v473
    %v476 = vshrl.u32 %v381, 16
    %v478 = vshll.u32 %v381, 16
    %v480 = vrot.slane %v478, 1
    %v481 = vor.u32 %v476, %v480
    %v483 = vshrl.u32 %v382, 16
    %v485 = vshll.u32 %v382, 16
    %v487 = vrot.slane %v485, 1
    %v488 = vor.u32 %v483, %v487
    %489 = vrot.lane.b32.xlu0 %v390, 4
    %v490 = vpop.permute.xlu0 %489
    %491 = vrot.lane.b32.xlu0 %v397, 4
    %v492 = vpop.permute.xlu0 %491
    %493 = vrot.lane.b32.xlu0 %v404, 4
    %v494 = vpop.permute.xlu0 %493
    %495 = vrot.lane.b32.xlu0 %v411, 4
    %v496 = vpop.permute.xlu0 %495
    %497 = vrot.lane.b32.xlu0 %v418, 4
    %v498 = vpop.permute.xlu0 %497
    %499 = vrot.lane.b32.xlu0 %v425, 4
    %v500 = vpop.permute.xlu0 %499
    %501 = vrot.lane.b32.xlu0 %v432, 4
    %v502 = vpop.permute.xlu0 %501
    %503 = vrot.lane.b32.xlu0 %v439, 4
    %v504 = vpop.permute.xlu0 %503
    %505 = vrot.lane.b32.xlu0 %v446, 4
    %v506 = vpop.permute.xlu0 %505
    %507 = vrot.lane.b32.xlu0 %v453, 4
    %v508 = vpop.permute.xlu0 %507
    %509 = vrot.lane.b32.xlu0 %v460, 4
    %v510 = vpop.permute.xlu0 %509
    %511 = vrot.lane.b32.xlu0 %v467, 4
    %v512 = vpop.permute.xlu0 %511
    %513 = vrot.lane.b32.xlu0 %v474, 4
    %v514 = vpop.permute.xlu0 %513
    %515 = vrot.lane.b32.xlu0 %v481, 4
    %v516 = vpop.permute.xlu0 %515
    %517 = vrot.lane.b32.xlu0 %v488, 4
    %v518 = vpop.permute.xlu0 %517
    %v534 = vrot.slane 0, 1
    %v535 = vrot.slane %v368, 1
    %v536 = vrot.slane %v369, 1
    %v537 = vrot.slane %v370, 1
    %v538 = vrot.slane %v371, 1
    %v539 = vrot.slane %v372, 1
    %v540 = vrot.slane %v373, 1
    %v541 = vrot.slane %v374, 1
    %v542 = vrot.slane %v376, 1
    %v543 = vrot.slane %v377, 1
    %v544 = vrot.slane %v378, 1
    %v545 = vrot.slane %v379, 1
    %v546 = vrot.slane %v380, 1
    %v547 = vrot.slane %v381, 1
    %v548 = vrot.slane %v382, 1
    %549 = vrot.lane.b32.xlu0 %v534, 8
    %v550 = vpop.permute.xlu0 %549
    %551 = vrot.lane.b32.xlu0 %v535, 8
    %v552 = vpop.permute.xlu0 %551
    %553 = vrot.lane.b32.xlu0 %v536, 8
    %v554 = vpop.permute.xlu0 %553
    %555 = vrot.lane.b32.xlu0 %v537, 8
    %v556 = vpop.permute.xlu0 %555
    %557 = vrot.lane.b32.xlu0 %v538, 8
    %v558 = vpop.permute.xlu0 %557
    %559 = vrot.lane.b32.xlu0 %v539, 8
    %v560 = vpop.permute.xlu0 %559
    %561 = vrot.lane.b32.xlu0 %v540, 8
    %v562 = vpop.permute.xlu0 %561
    %563 = vrot.lane.b32.xlu0 %v541, 8
    %v564 = vpop.permute.xlu0 %563
    %565 = vrot.lane.b32.xlu0 %v542, 8
    %v566 = vpop.permute.xlu0 %565
    %567 = vrot.lane.b32.xlu0 %v543, 8
    %v568 = vpop.permute.xlu0 %567
    %569 = vrot.lane.b32.xlu0 %v544, 8
    %v570 = vpop.permute.xlu0 %569
    %571 = vrot.lane.b32.xlu0 %v545, 8
    %v572 = vpop.permute.xlu0 %571
    %573 = vrot.lane.b32.xlu0 %v546, 8
    %v574 = vpop.permute.xlu0 %573
    %575 = vrot.lane.b32.xlu0 %v547, 8
    %v576 = vpop.permute.xlu0 %575
    %577 = vrot.lane.b32.xlu0 %v548, 8
    %v578 = vpop.permute.xlu0 %577
    %vm579 = vcmask 31744
    %v581 = vsel %vm579, 0, %v490
    %v583 = vsel %vm579, %v368, %v492
    %v585 = vsel %vm579, %v369, %v494
    %v587 = vsel %vm579, %v370, %v496
    %v589 = vsel %vm579, %v371, %v498
    %v591 = vsel %vm579, %v372, %v500
    %v593 = vsel %vm579, %v373, %v502
    %v595 = vsel %vm579, %v374, %v504
    %v597 = vsel %vm579, %v376, %v506
    %v599 = vsel %vm579, %v377, %v508
    %v601 = vsel %vm579, %v378, %v510
    %v603 = vsel %vm579, %v379, %v512
    %v605 = vsel %vm579, %v380, %v514
    %v607 = vsel %vm579, %v381, %v516
    %v609 = vsel %vm579, %v382, %v518
    %vm610 = vcmask 64512
    %v612 = vsel %vm610, %v581, %v550
    %v614 = vsel %vm610, %v583, %v552
    %v616 = vsel %vm610, %v585, %v554
    %v618 = vsel %vm610, %v587, %v556
    %v620 = vsel %vm610, %v589, %v558
    %v622 = vsel %vm610, %v591, %v560
    %v624 = vsel %vm610, %v593, %v562
    %v626 = vsel %vm610, %v595, %v564
    %v628 = vsel %vm610, %v597, %v566
    %v630 = vsel %vm610, %v599, %v568
    %v632 = vsel %vm610, %v601, %v570
    %v634 = vsel %vm610, %v603, %v572
    %v636 = vsel %vm610, %v605, %v574
    %v638 = vsel %vm610, %v607, %v576
    %v640 = vsel %vm610, %v609, %v578
    %v641 = vld [vmem:[%s1] sm:$0xf]
    %v642 = vld [vmem:[%s1 + $0x4] sm:$0x3]
    %v644 = vshrl.u32 %v375, 16
    %v646 = vshll.u32 %v375, 16
    %v648 = vrot.slane %v646, 1
    %v649 = vor.u32 %v644, %v648
    %v651 = vshrl.u32 %v383, 16
    %v653 = vshll.u32 %v383, 16
    %v655 = vrot.slane %v653, 1
    %v656 = vor.u32 %v651, %v655
    %657 = vrot.lane.b32.xlu0 %v649, 4
    %v658 = vpop.permute.xlu0 %657
    %659 = vrot.lane.b32.xlu0 %v656, 4
    %v660 = vpop.permute.xlu0 %659
    %v663 = vrot.slane %v375, 1
    %v664 = vrot.slane %v383, 1
    %665 = vrot.lane.b32.xlu0 %v663, 8
    %v666 = vpop.permute.xlu0 %665
    %667 = vrot.lane.b32.xlu0 %v664, 8
    %v668 = vpop.permute.xlu0 %667
    %v670 = vsel %vm579, %v375, %v658
    %v672 = vsel %vm579, %v383, %v660
    %v674 = vsel %vm610, %v670, %v666
    %v676 = vsel %vm610, %v672, %v668
    %s677 = scalar_lea.vmem %s1, 8
    %v678 = vld [vmem:[%s677] sm:$0xf]
    %v679 = vld [vmem:[%s677 + $0x4] sm:$0x3]
    %v696 = vunpack.c.l.b16 %v614
    %v697 = vunpack.c.l.b16 %v616
    %v698 = vunpack.c.l.b16 %v618
    %v699 = vunpack.c.l.b16 %v620
    %v700 = vunpack.c.l.b16 %v622
    %v701 = vunpack.c.l.b16 %v624
    %v702 = vunpack.c.l.b16 %v626
    %v703 = vunpack.c.l.b16 %v674
    %v704 = vunpack.c.l.b16 %v628
    %v705 = vunpack.c.l.b16 %v630
    %v706 = vunpack.c.l.b16 %v632
    %v707 = vunpack.c.l.b16 %v634
    %v708 = vunpack.c.l.b16 %v636
    %v709 = vunpack.c.l.b16 %v638
    %v710 = vunpack.c.l.b16 %v640
    %v711 = vunpack.c.l.b16 %v676
    %v712 = vpack.c.b16 %v697, %v696
    %v713 = vpack.c.b16 %v699, %v698
    %v714 = vpack.c.b16 %v701, %v700
    %v715 = vpack.c.b16 %v703, %v702
    %v716 = vpack.c.b16 %v705, %v704
    %v717 = vpack.c.b16 %v707, %v706
    %v718 = vpack.c.b16 %v709, %v708
    %v719 = vpack.c.b16 %v711, %v710
    %v722 = vunpack.c.l.b16 %v678
    %v723 = vunpack.c.l.b16 %v679
    %v724 = vpack.c.b16 %v723, %v722
    %vm725 = vcmask 97280
    %v727 = vsel %vm725, %v712, 0
    %v730 = vsel %vm725, %v713, 0
    %v733 = vsel %vm725, %v714, 0
    %v736 = vsel %vm725, %v715, 0
    %v739 = vsel %vm725, %v716, 0
    %v742 = vsel %vm725, %v717, 0
    %v745 = vsel %vm725, %v718, 0
    %v748 = vsel %vm725, %v719, 0
    %vm750 = vcmask 1045504
    %v752 = vsel %vm750, %v724, 0
    %754 = vmatprep.subr.bf16.mxu0 0
    %755 = vmatpush1.bf16.msra.mxu0 %v752
    %756 = vmatprep.subr.bf16.mxu0 0
    %757 = vmatpush1.bf16.msra.mxu0 0
    %758 = vmatprep.subr.bf16.mxu0 0
    %759 = vmatpush1.bf16.msra.mxu0 0
    %760 = vmatprep.subr.bf16.mxu0 0
    %761 = vmatpush1.bf16.msra.mxu0 0
    %762 = vmatprep.subr.bf16.mxu0 0
    %763 = vmatpush1.bf16.msra.mxu0 0
    %764 = vmatprep.subr.bf16.mxu0 0
    %765 = vmatpush1.bf16.msra.mxu0 0
    %766 = vmatprep.subr.bf16.mxu0 0
    %767 = vmatpush1.bf16.msra.mxu0 0
    %768 = vmatprep.subr.bf16.mxu0 0
    %769 = vmatpush1.bf16.msra.mxu0 0
    %770 = vmatprep.subr.bf16.mxu0 0
    %771 = vmatpush1.bf16.msra.mxu0 0
    %772 = vmatprep.subr.bf16.mxu0 0
    %773 = vmatpush1.bf16.msra.mxu0 0
    %774 = vmatprep.subr.bf16.mxu0 0
    %775 = vmatpush1.bf16.msra.mxu0 0
    %776 = vmatprep.subr.bf16.mxu0 0
    %777 = vmatpush1.bf16.msra.mxu0 0
    %778 = vmatprep.subr.bf16.mxu0 0
    %779 = vmatpush1.bf16.msra.mxu0 0
    %780 = vmatprep.subr.bf16.mxu0 0
    %781 = vmatpush1.bf16.msra.mxu0 0
    %782 = vmatprep.subr.bf16.mxu0 0
    %783 = vmatpush1.bf16.msra.mxu0 0
    %784 = vmatprep.subr.bf16.mxu0 0
    %785 = vmatpush1.bf16.msra.mxu0 0
    %786 = vmatprep.mubr.bf16.mxu0 0
    %787 = vmatmul.mubr.bf16.gmra.mrb[0].mxu0 %v727
    %v788 = vpop.f32.mrb[0].mxu0
    %v789 = vadd.f32 0.0, %v788
    %v790 = vpop.f32.mrb[0].mxu0
    %v791 = vpop.f32.mrb[0].mxu0
    %v792 = vadd.f32 0.0, %v791
    %v793 = vpop.f32.mrb[0].mxu0
    %794 = vmatprep.mubr.bf16.mxu0 0
    %795 = vmatmul.mubr.bf16.gmra.mrb[0].mxu0 %v730
    %v796 = vpop.f32.mrb[0].mxu0
    %v797 = vadd.f32 0.0, %v796
    %v798 = vpop.f32.mrb[0].mxu0
    %v799 = vpop.f32.mrb[0].mxu0
    %v800 = vadd.f32 0.0, %v799
    %v801 = vpop.f32.mrb[0].mxu0
    %802 = vmatprep.mubr.bf16.mxu0 0
    %803 = vmatmul.mubr.bf16.gmra.mrb[0].mxu0 %v733
    %v804 = vpop.f32.mrb[0].mxu0
    %v805 = vadd.f32 0.0, %v804
    %v806 = vpop.f32.mrb[0].mxu0
    %v807 = vpop.f32.mrb[0].mxu0
    %v808 = vadd.f32 0.0, %v807
    %v809 = vpop.f32.mrb[0].mxu0
    %810 = vmatprep.mubr.bf16.mxu0 0
    %811 = vmatmul.mubr.bf16.gmra.mrb[0].mxu0 %v736
    %v812 = vpop.f32.mrb[0].mxu0
    %v813 = vadd.f32 0.0, %v812
    %v814 = vpop.f32.mrb[0].mxu0
    %v815 = vpop.f32.mrb[0].mxu0
    %v816 = vadd.f32 0.0, %v815
    %v817 = vpop.f32.mrb[0].mxu0
    %818 = vmatprep.mubr.bf16.mxu0 0
    %819 = vmatmul.mubr.bf16.gmra.mrb[0].mxu0 %v739
    %v820 = vpop.f32.mrb[0].mxu0
    %v821 = vadd.f32 0.0, %v820
    %v822 = vpop.f32.mrb[0].mxu0
    %v823 = vpop.f32.mrb[0].mxu0
    %v824 = vadd.f32 0.0, %v823
    %v825 = vpop.f32.mrb[0].mxu0
    %826 = vmatprep.mubr.bf16.mxu0 0
    %827 = vmatmul.mubr.bf16.gmra.mrb[0].mxu0 %v742
    %v828 = vpop.f32.mrb[0].mxu0
    %v829 = vadd.f32 0.0, %v828
    %v830 = vpop.f32.mrb[0].mxu0
    %v831 = vpop.f32.mrb[0].mxu0
    %v832 = vadd.f32 0.0, %v831
    %v833 = vpop.f32.mrb[0].mxu0
    %834 = vmatprep.mubr.bf16.mxu0 0
    %835 = vmatmul.mubr.bf16.gmra.mrb[0].mxu0 %v745
    %v836 = vpop.f32.mrb[0].mxu0
    %v837 = vadd.f32 0.0, %v836
    %v838 = vpop.f32.mrb[0].mxu0
    %v839 = vpop.f32.mrb[0].mxu0
    %v840 = vadd.f32 0.0, %v839
    %v841 = vpop.f32.mrb[0].mxu0
    %842 = vmatprep.mubr.bf16.mxu0 0
    %843 = vmatmul.mubr.bf16.gmra.mrb[0].mxu0 %v748
    %v844 = vpop.f32.mrb[0].mxu0
    %v845 = vadd.f32 0.0, %v844
    %v846 = vpop.f32.mrb[0].mxu0
    %v847 = vpop.f32.mrb[0].mxu0
    %v848 = vadd.f32 0.0, %v847
    %v849 = vpop.f32.mrb[0].mxu0
    %850 = vdwg.mxu0
    %v852 = vunpack.c.l.b16 %v612
    %v853 = vpack.c.b16 %v696, %v852
    %v854 = vpack.c.b16 %v698, %v697
    %v855 = vpack.c.b16 %v700, %v699
    %v856 = vpack.c.b16 %v702, %v701
    %v857 = vpack.c.b16 %v704, %v852
    %v858 = vpack.c.b16 %v706, %v705
    %v859 = vpack.c.b16 %v708, %v707
    %v860 = vpack.c.b16 %v710, %v709
    %v863 = vunpack.c.l.b16 %v641
    %v864 = vunpack.c.l.b16 %v642
    %v865 = vpack.c.b16 %v864, %v863
    %v867 = vsel %vm725, %v853, 0
    %v870 = vsel %vm725, %v854, 0
    %v873 = vsel %vm725, %v855, 0
    %v876 = vsel %vm725, %v856, 0
    %v879 = vsel %vm725, %v857, 0
    %v882 = vsel %vm725, %v858, 0
    %v885 = vsel %vm725, %v859, 0
    %v888 = vsel %vm725, %v860, 0
    %v891 = vsel %vm750, %v865, 0
    %893 = vmatprep.subr.bf16.mxu0 0
    %894 = vmatpush1.bf16.msra.mxu0 %v891
    %895 = vmatprep.subr.bf16.mxu0 0
    %896 = vmatpush1.bf16.msra.mxu0 0
    %897 = vmatprep.subr.bf16.mxu0 0
    %898 = vmatpush1.bf16.msra.mxu0 0
    %899 = vmatprep.subr.bf16.mxu0 0
    %900 = vmatpush1.bf16.msra.mxu0 0
    %901 = vmatprep.subr.bf16.mxu0 0
    %902 = vmatpush1.bf16.msra.mxu0 0
    %903 = vmatprep.subr.bf16.mxu0 0
    %904 = vmatpush1.bf16.msra.mxu0 0
    %905 = vmatprep.subr.bf16.mxu0 0
    %906 = vmatpush1.bf16.msra.mxu0 0
    %907 = vmatprep.subr.bf16.mxu0 0
    %908 = vmatpush1.bf16.msra.mxu0 0
    %909 = vmatprep.subr.bf16.mxu0 0
    %910 = vmatpush1.bf16.msra.mxu0 0
    %911 = vmatprep.subr.bf16.mxu0 0
    %912 = vmatpush1.bf16.msra.mxu0 0
    %913 = vmatprep.subr.bf16.mxu0 0
    %914 = vmatpush1.bf16.msra.mxu0 0
    %915 = vmatprep.subr.bf16.mxu0 0
    %916 = vmatpush1.bf16.msra.mxu0 0
    %917 = vmatprep.subr.bf16.mxu0 0
    %918 = vmatpush1.bf16.msra.mxu0 0
    %919 = vmatprep.subr.bf16.mxu0 0
    %920 = vmatpush1.bf16.msra.mxu0 0
    %921 = vmatprep.subr.bf16.mxu0 0
    %922 = vmatpush1.bf16.msra.mxu0 0
    %923 = vmatprep.subr.bf16.mxu0 0
    %924 = vmatpush1.bf16.msra.mxu0 0
    %925 = vmatprep.mubr.bf16.mxu0 0
    %926 = vmatmul.mubr.bf16.gmra.mrb[0].mxu0 %v867
    %v927 = vpop.f32.mrb[0].mxu0
    %v928 = vadd.f32 %v789, %v927
    %v929 = vpop.f32.mrb[0].mxu0
    %v930 = vpop.f32.mrb[0].mxu0
    %v931 = vadd.f32 %v792, %v930
    %v932 = vpop.f32.mrb[0].mxu0
    %933 = vmatprep.mubr.bf16.mxu0 0
    %934 = vmatmul.mubr.bf16.gmra.mrb[0].mxu0 %v870
    %v935 = vpop.f32.mrb[0].mxu0
    %v936 = vadd.f32 %v797, %v935
    %v937 = vpop.f32.mrb[0].mxu0
    %v938 = vpop.f32.mrb[0].mxu0
    %v939 = vadd.f32 %v800, %v938
    %v940 = vpop.f32.mrb[0].mxu0
    %941 = vmatprep.mubr.bf16.mxu0 0
    %942 = vmatmul.mubr.bf16.gmra.mrb[0].mxu0 %v873
    %v943 = vpop.f32.mrb[0].mxu0
    %v944 = vadd.f32 %v805, %v943
    %v945 = vpop.f32.mrb[0].mxu0
    %v946 = vpop.f32.mrb[0].mxu0
    %v947 = vadd.f32 %v808, %v946
    %v948 = vpop.f32.mrb[0].mxu0
    %949 = vmatprep.mubr.bf16.mxu0 0
    %950 = vmatmul.mubr.bf16.gmra.mrb[0].mxu0 %v876
    %v951 = vpop.f32.mrb[0].mxu0
    %v952 = vadd.f32 %v813, %v951
    %v953 = vpop.f32.mrb[0].mxu0
    %v954 = vpop.f32.mrb[0].mxu0
    %v955 = vadd.f32 %v816, %v954
    %v956 = vpop.f32.mrb[0].mxu0
    %957 = vmatprep.mubr.bf16.mxu0 0
    %958 = vmatmul.mubr.bf16.gmra.mrb[0].mxu0 %v879
    %v959 = vpop.f32.mrb[0].mxu0
    %v960 = vadd.f32 %v821, %v959
    %v961 = vpop.f32.mrb[0].mxu0
    %v962 = vpop.f32.mrb[0].mxu0
    %v963 = vadd.f32 %v824, %v962
    %v964 = vpop.f32.mrb[0].mxu0
    %965 = vmatprep.mubr.bf16.mxu0 0
    %966 = vmatmul.mubr.bf16.gmra.mrb[0].mxu0 %v882
    %v967 = vpop.f32.mrb[0].mxu0
    %v968 = vadd.f32 %v829, %v967
    %v969 = vpop.f32.mrb[0].mxu0
    %v970 = vpop.f32.mrb[0].mxu0
    %v971 = vadd.f32 %v832, %v970
    %v972 = vpop.f32.mrb[0].mxu0
    %973 = vmatprep.mubr.bf16.mxu0 0
    %974 = vmatmul.mubr.bf16.gmra.mrb[0].mxu0 %v885
    %v975 = vpop.f32.mrb[0].mxu0
    %v976 = vadd.f32 %v837, %v975
    %v977 = vpop.f32.mrb[0].mxu0
    %v978 = vpop.f32.mrb[0].mxu0
    %v979 = vadd.f32 %v840, %v978
    %v980 = vpop.f32.mrb[0].mxu0
    %981 = vmatprep.mubr.bf16.mxu0 0
    %982 = vmatmul.mubr.bf16.gmra.mrb[0].mxu0 %v888
    %v983 = vpop.f32.mrb[0].mxu0
    %v984 = vadd.f32 %v845, %v983
    %v985 = vpop.f32.mrb[0].mxu0
    %v986 = vpop.f32.mrb[0].mxu0
    %v987 = vadd.f32 %v848, %v986
    %v988 = vpop.f32.mrb[0].mxu0
    %989 = vdwg.mxu0
    %s990 = scalar_lea.vmem %s1, 16
    %v991 = vld [vmem:[%s990] sm:$0xf]
    %v992 = vld [vmem:[%s990 + $0x4] sm:$0x3]
    %v993 = vpack.c.b16 %v852, %v703
    %v994 = vpack.c.b16 %v852, %v711
    %v997 = vunpack.c.l.b16 %v991
    %v998 = vunpack.c.l.b16 %v992
    %v999 = vpack.c.b16 %v998, %v997
    %v1001 = vsel %vm725, %v993, 0
    %v1004 = vsel %vm725, %v994, 0
    %v1007 = vsel %vm750, %v999, 0
    %1009 = vmatprep.subr.bf16.mxu0 0
    %1010 = vmatpush1.bf16.msra.mxu0 %v1007
    %1011 = vmatprep.subr.bf16.mxu0 0
    %1012 = vmatpush1.bf16.msra.mxu0 0
    %1013 = vmatprep.subr.bf16.mxu0 0
    %1014 = vmatpush1.bf16.msra.mxu0 0
    %1015 = vmatprep.subr.bf16.mxu0 0
    %1016 = vmatpush1.bf16.msra.mxu0 0
    %1017 = vmatprep.subr.bf16.mxu0 0
    %1018 = vmatpush1.bf16.msra.mxu0 0
    %1019 = vmatprep.subr.bf16.mxu0 0
    %1020 = vmatpush1.bf16.msra.mxu0 0
    %1021 = vmatprep.subr.bf16.mxu0 0
    %1022 = vmatpush1.bf16.msra.mxu0 0
    %1023 = vmatprep.subr.bf16.mxu0 0
    %1024 = vmatpush1.bf16.msra.mxu0 0
    %1025 = vmatprep.subr.bf16.mxu0 0
    %1026 = vmatpush1.bf16.msra.mxu0 0
    %1027 = vmatprep.subr.bf16.mxu0 0
    %1028 = vmatpush1.bf16.msra.mxu0 0
    %1029 = vmatprep.subr.bf16.mxu0 0
    %1030 = vmatpush1.bf16.msra.mxu0 0
    %1031 = vmatprep.subr.bf16.mxu0 0
    %1032 = vmatpush1.bf16.msra.mxu0 0
    %1033 = vmatprep.subr.bf16.mxu0 0
    %1034 = vmatpush1.bf16.msra.mxu0 0
    %1035 = vmatprep.subr.bf16.mxu0 0
    %1036 = vmatpush1.bf16.msra.mxu0 0
    %1037 = vmatprep.subr.bf16.mxu0 0
    %1038 = vmatpush1.bf16.msra.mxu0 0
    %1039 = vmatprep.subr.bf16.mxu0 0
    %1040 = vmatpush1.bf16.msra.mxu0 0
    %1041 = vmatprep.mubr.bf16.mxu0 0
    %1042 = vmatmul.mubr.bf16.gmra.mrb[0].mxu0 %v870
    %v1043 = vpop.f32.mrb[0].mxu0
    %v1044 = vadd.f32 0.0, %v1043
    %v1045 = vpop.f32.mrb[0].mxu0
    %v1046 = vpop.f32.mrb[0].mxu0
    %v1047 = vadd.f32 0.0, %v1046
    %v1048 = vpop.f32.mrb[0].mxu0
    %1049 = vmatprep.mubr.bf16.mxu0 0
    %1050 = vmatmul.mubr.bf16.gmra.mrb[0].mxu0 %v873
    %v1051 = vpop.f32.mrb[0].mxu0
    %v1052 = vadd.f32 0.0, %v1051
    %v1053 = vpop.f32.mrb[0].mxu0
    %v1054 = vpop.f32.mrb[0].mxu0
    %v1055 = vadd.f32 0.0, %v1054
    %v1056 = vpop.f32.mrb[0].mxu0
    %1057 = vmatprep.mubr.bf16.mxu0 0
    %1058 = vmatmul.mubr.bf16.gmra.mrb[0].mxu0 %v876
    %v1059 = vpop.f32.mrb[0].mxu0
    %v1060 = vadd.f32 0.0, %v1059
    %v1061 = vpop.f32.mrb[0].mxu0
    %v1062 = vpop.f32.mrb[0].mxu0
    %v1063 = vadd.f32 0.0, %v1062
    %v1064 = vpop.f32.mrb[0].mxu0
    %1065 = vmatprep.mubr.bf16.mxu0 0
    %1066 = vmatmul.mubr.bf16.gmra.mrb[0].mxu0 %v1001
    %v1067 = vpop.f32.mrb[0].mxu0
    %v1068 = vadd.f32 0.0, %v1067
    %v1069 = vpop.f32.mrb[0].mxu0
    %v1070 = vpop.f32.mrb[0].mxu0
    %v1071 = vadd.f32 0.0, %v1070
    %v1072 = vpop.f32.mrb[0].mxu0
    %1073 = vmatprep.mubr.bf16.mxu0 0
    %1074 = vmatmul.mubr.bf16.gmra.mrb[0].mxu0 %v882
    %v1075 = vpop.f32.mrb[0].mxu0
    %v1076 = vadd.f32 0.0, %v1075
    %v1077 = vpop.f32.mrb[0].mxu0
    %v1078 = vpop.f32.mrb[0].mxu0
    %v1079 = vadd.f32 0.0, %v1078
    %v1080 = vpop.f32.mrb[0].mxu0
    %1081 = vmatprep.mubr.bf16.mxu0 0
    %1082 = vmatmul.mubr.bf16.gmra.mrb[0].mxu0 %v885
    %v1083 = vpop.f32.mrb[0].mxu0
    %v1084 = vadd.f32 0.0, %v1083
    %v1085 = vpop.f32.mrb[0].mxu0
    %v1086 = vpop.f32.mrb[0].mxu0
    %v1087 = vadd.f32 0.0, %v1086
    %v1088 = vpop.f32.mrb[0].mxu0
    %1089 = vmatprep.mubr.bf16.mxu0 0
    %1090 = vmatmul.mubr.bf16.gmra.mrb[0].mxu0 %v888
    %v1091 = vpop.f32.mrb[0].mxu0
    %v1092 = vadd.f32 0.0, %v1091
    %v1093 = vpop.f32.mrb[0].mxu0
    %v1094 = vpop.f32.mrb[0].mxu0
    %v1095 = vadd.f32 0.0, %v1094
    %v1096 = vpop.f32.mrb[0].mxu0
    %1097 = vmatprep.mubr.bf16.mxu0 0
    %1098 = vmatmul.mubr.bf16.gmra.mrb[0].mxu0 %v1004
    %v1099 = vpop.f32.mrb[0].mxu0
    %v1100 = vadd.f32 0.0, %v1099
    %v1101 = vpop.f32.mrb[0].mxu0
    %v1102 = vpop.f32.mrb[0].mxu0
    %v1103 = vadd.f32 0.0, %v1102
    %v1104 = vpop.f32.mrb[0].mxu0
    %1105 = vdwg.mxu0
    %v1106 = vadd.f32 %v928, %v1044
    %v1107 = vadd.f32 %v931, %v1047
    %v1108 = vadd.f32 %v936, %v1052
    %v1109 = vadd.f32 %v939, %v1055
    %v1110 = vadd.f32 %v944, %v1060
    %v1111 = vadd.f32 %v947, %v1063
    %v1112 = vadd.f32 %v952, %v1068
    %v1113 = vadd.f32 %v955, %v1071
    %v1114 = vadd.f32 %v960, %v1076
    %v1115 = vadd.f32 %v963, %v1079
    %v1116 = vadd.f32 %v968, %v1084
    %v1117 = vadd.f32 %v971, %v1087
    %v1118 = vadd.f32 %v976, %v1092
    %v1119 = vadd.f32 %v979, %v1095
    %v1120 = vadd.f32 %v984, %v1100
    %v1121 = vadd.f32 %v987, %v1103
    %v1122 = vld [vmem:[%s2] sm:$0x1]
    %v1124 = vlaneseq
    %v1125 = vshrl.u32 %v1124, 7
    %v1126 = vsub.s32 0, %v1125
    %v1127 = vrot.slane %v1122, %v1126
    %v1129 = vmul.f32 %v1106, %v1127
    %v1130 = vmul.f32 %v1107, %v1127
    %v1131 = vmul.f32 %v1108, %v1127
    %v1132 = vmul.f32 %v1109, %v1127
    %v1133 = vmul.f32 %v1110, %v1127
    %v1134 = vmul.f32 %v1111, %v1127
    %v1135 = vmul.f32 %v1112, %v1127
    %v1136 = vmul.f32 %v1113, %v1127
    %v1137 = vmul.f32 %v1114, %v1127
    %v1138 = vmul.f32 %v1115, %v1127
    %v1139 = vmul.f32 %v1116, %v1127
    %v1140 = vmul.f32 %v1117, %v1127
    %v1141 = vmul.f32 %v1118, %v1127
    %v1142 = vmul.f32 %v1119, %v1127
    %v1143 = vmul.f32 %v1120, %v1127
    %v1144 = vmul.f32 %v1121, %v1127
    %v1145 = vld [vmem:[%s3] sm:$0x1]
    %v1147 = vlaneseq
    %v1148 = vshrl.u32 %v1147, 7
    %v1149 = vsub.s32 0, %v1148
    %v1150 = vrot.slane %v1145, %v1149
    %v1152 = vadd.f32 %v1129, %v1150
    %v1153 = vadd.f32 %v1130, %v1150
    %v1154 = vadd.f32 %v1131, %v1150
    %v1155 = vadd.f32 %v1132, %v1150
    %v1156 = vadd.f32 %v1133, %v1150
    %v1157 = vadd.f32 %v1134, %v1150
    %v1158 = vadd.f32 %v1135, %v1150
    %v1159 = vadd.f32 %v1136, %v1150
    %v1160 = vadd.f32 %v1137, %v1150
    %v1161 = vadd.f32 %v1138, %v1150
    %v1162 = vadd.f32 %v1139, %v1150
    %v1163 = vadd.f32 %v1140, %v1150
    %v1164 = vadd.f32 %v1141, %v1150
    %v1165 = vadd.f32 %v1142, %v1150
    %v1166 = vadd.f32 %v1143, %v1150
    %v1167 = vadd.f32 %v1144, %v1150
    %v1168 = vmax.f32 %v1152, 0.0
    %v1169 = vmax.f32 %v1153, 0.0
    %v1170 = vmax.f32 %v1154, 0.0
    %v1171 = vmax.f32 %v1155, 0.0
    %v1172 = vmax.f32 %v1156, 0.0
    %v1173 = vmax.f32 %v1157, 0.0
    %v1174 = vmax.f32 %v1158, 0.0
    %v1175 = vmax.f32 %v1159, 0.0
    %v1176 = vmax.f32 %v1160, 0.0
    %v1177 = vmax.f32 %v1161, 0.0
    %v1178 = vmax.f32 %v1162, 0.0
    %v1179 = vmax.f32 %v1163, 0.0
    %v1180 = vmax.f32 %v1164, 0.0
    %v1181 = vmax.f32 %v1165, 0.0
    %v1182 = vmax.f32 %v1166, 0.0
    %v1183 = vmax.f32 %v1167, 0.0
    %v1184 = vpack.c.bf16 %v1168, %v1168
    %v1185 = vpack.c.bf16 %v1169, %v1169
    %v1186 = vpack.c.bf16 %v1170, %v1170
    %v1187 = vpack.c.bf16 %v1171, %v1171
    %v1188 = vpack.c.bf16 %v1172, %v1172
    %v1189 = vpack.c.bf16 %v1173, %v1173
    %v1190 = vpack.c.bf16 %v1174, %v1174
    %v1191 = vpack.c.bf16 %v1175, %v1175
    %v1192 = vpack.c.bf16 %v1176, %v1176
    %v1193 = vpack.c.bf16 %v1177, %v1177
    %v1194 = vpack.c.bf16 %v1178, %v1178
    %v1195 = vpack.c.bf16 %v1179, %v1179
    %v1196 = vpack.c.bf16 %v1180, %v1180
    %v1197 = vpack.c.bf16 %v1181, %v1181
    %v1198 = vpack.c.bf16 %v1182, %v1182
    %v1199 = vpack.c.bf16 %v1183, %v1183
    %v1201 = vshrl.u32 %v1184, 16
    %v1203 = vrot.slane %v1201, 7
    %v1204 = vshll.u32 %v1184, 16
    %v1206 = vor.u32 %v1203, %v1204
    %v1208 = vshrl.u32 %v1185, 16
    %v1210 = vrot.slane %v1208, 7
    %v1211 = vshll.u32 %v1185, 16
    %v1213 = vor.u32 %v1210, %v1211
    %v1215 = vshrl.u32 %v1186, 16
    %v1217 = vrot.slane %v1215, 7
    %v1218 = vshll.u32 %v1186, 16
    %v1220 = vor.u32 %v1217, %v1218
    %v1222 = vshrl.u32 %v1187, 16
    %v1224 = vrot.slane %v1222, 7
    %v1225 = vshll.u32 %v1187, 16
    %v1227 = vor.u32 %v1224, %v1225
    %v1229 = vshrl.u32 %v1188, 16
    %v1231 = vrot.slane %v1229, 7
    %v1232 = vshll.u32 %v1188, 16
    %v1234 = vor.u32 %v1231, %v1232
    %v1236 = vshrl.u32 %v1189, 16
    %v1238 = vrot.slane %v1236, 7
    %v1239 = vshll.u32 %v1189, 16
    %v1241 = vor.u32 %v1238, %v1239
    %v1243 = vshrl.u32 %v1190, 16
    %v1245 = vrot.slane %v1243, 7
    %v1246 = vshll.u32 %v1190, 16
    %v1248 = vor.u32 %v1245, %v1246
    %v1250 = vshrl.u32 %v1191, 16
    %v1252 = vrot.slane %v1250, 7
    %v1253 = vshll.u32 %v1191, 16
    %v1255 = vor.u32 %v1252, %v1253
    %v1257 = vshrl.u32 %v1192, 16
    %v1259 = vrot.slane %v1257, 7
    %v1260 = vshll.u32 %v1192, 16
    %v1262 = vor.u32 %v1259, %v1260
    %v1264 = vshrl.u32 %v1193, 16
    %v1266 = vrot.slane %v1264, 7
    %v1267 = vshll.u32 %v1193, 16
    %v1269 = vor.u32 %v1266, %v1267
    %v1271 = vshrl.u32 %v1194, 16
    %v1273 = vrot.slane %v1271, 7
    %v1274 = vshll.u32 %v1194, 16
    %v1276 = vor.u32 %v1273, %v1274
    %v1278 = vshrl.u32 %v1195, 16
    %v1280 = vrot.slane %v1278, 7
    %v1281 = vshll.u32 %v1195, 16
    %v1283 = vor.u32 %v1280, %v1281
    %v1285 = vshrl.u32 %v1196, 16
    %v1287 = vrot.slane %v1285, 7
    %v1288 = vshll.u32 %v1196, 16
    %v1290 = vor.u32 %v1287, %v1288
    %v1292 = vshrl.u32 %v1197, 16
    %v1294 = vrot.slane %v1292, 7
    %v1295 = vshll.u32 %v1197, 16
    %v1297 = vor.u32 %v1294, %v1295
    %v1299 = vshrl.u32 %v1198, 16
    %v1301 = vrot.slane %v1299, 7
    %v1302 = vshll.u32 %v1198, 16
    %v1304 = vor.u32 %v1301, %v1302
    %v1306 = vshrl.u32 %v1199, 16
    %v1308 = vrot.slane %v1306, 7
    %v1309 = vshll.u32 %v1199, 16
    %v1311 = vor.u32 %v1308, %v1309
    %v1328 = vsel %vm348, 0, %v1206
    %v1329 = vsel %vm348, 0, %v1213
    %v1330 = vsel %vm348, 0, %v1220
    %v1331 = vsel %vm348, 0, %v1227
    %v1332 = vsel %vm348, 0, %v1234
    %v1333 = vsel %vm348, 0, %v1241
    %v1334 = vsel %vm348, 0, %v1248
    %v1335 = vsel %vm348, 0, %v1255
    %v1336 = vsel %vm348, 0, %v1262
    %v1337 = vsel %vm348, 0, %v1269
    %v1338 = vsel %vm348, 0, %v1276
    %v1339 = vsel %vm348, 0, %v1283
    %v1340 = vsel %vm348, 0, %v1290
    %v1341 = vsel %vm348, 0, %v1297
    %v1342 = vsel %vm348, 0, %v1304
    %v1343 = vsel %vm348, 0, %v1311
    %v1344 = vsel %vm367, %v1328, 0
    %v1345 = vsel %vm367, %v1329, 0
    %v1346 = vsel %vm367, %v1330, 0
    %v1347 = vsel %vm367, %v1331, 0
    %v1348 = vsel %vm367, %v1332, 0
    %v1349 = vsel %vm367, %v1333, 0
    %v1350 = vsel %vm367, %v1334, 0
    %v1351 = vsel %vm367, %v1335, 0
    %v1352 = vsel %vm367, %v1336, 0
    %v1353 = vsel %vm367, %v1337, 0
    %v1354 = vsel %vm367, %v1338, 0
    %v1355 = vsel %vm367, %v1339, 0
    %v1356 = vsel %vm367, %v1340, 0
    %v1357 = vsel %vm367, %v1341, 0
    %v1358 = vsel %vm367, %v1342, 0
    %v1359 = vsel %vm367, %v1343, 0
    %v1361 = vshrl.u32 %v1344, 16
    %v1363 = vshll.u32 %v1344, 16
    %v1365 = vrot.slane %v1363, 1
    %v1366 = vor.u32 %v1361, %v1365
    %v1368 = vshrl.u32 %v1345, 16
    %v1370 = vshll.u32 %v1345, 16
    %v1372 = vrot.slane %v1370, 1
    %v1373 = vor.u32 %v1368, %v1372
    %v1375 = vshrl.u32 %v1346, 16
    %v1377 = vshll.u32 %v1346, 16
    %v1379 = vrot.slane %v1377, 1
    %v1380 = vor.u32 %v1375, %v1379
    %v1382 = vshrl.u32 %v1347, 16
    %v1384 = vshll.u32 %v1347, 16
    %v1386 = vrot.slane %v1384, 1
    %v1387 = vor.u32 %v1382, %v1386
    %v1389 = vshrl.u32 %v1348, 16
    %v1391 = vshll.u32 %v1348, 16
    %v1393 = vrot.slane %v1391, 1
    %v1394 = vor.u32 %v1389, %v1393
    %v1396 = vshrl.u32 %v1349, 16
    %v1398 = vshll.u32 %v1349, 16
    %v1400 = vrot.slane %v1398, 1
    %v1401 = vor.u32 %v1396, %v1400
    %v1403 = vshrl.u32 %v1350, 16
    %v1405 = vshll.u32 %v1350, 16
    %v1407 = vrot.slane %v1405, 1
    %v1408 = vor.u32 %v1403, %v1407
    %v1410 = vshrl.u32 %v1352, 16
    %v1412 = vshll.u32 %v1352, 16
    %v1414 = vrot.slane %v1412, 1
    %v1415 = vor.u32 %v1410, %v1414
    %v1417 = vshrl.u32 %v1353, 16
    %v1419 = vshll.u32 %v1353, 16
    %v1421 = vrot.slane %v1419, 1
    %v1422 = vor.u32 %v1417, %v1421
    %v1424 = vshrl.u32 %v1354, 16
    %v1426 = vshll.u32 %v1354, 16
    %v1428 = vrot.slane %v1426, 1
    %v1429 = vor.u32 %v1424, %v1428
    %v1431 = vshrl.u32 %v1355, 16
    %v1433 = vshll.u32 %v1355, 16
    %v1435 = vrot.slane %v1433, 1
    %v1436 = vor.u32 %v1431, %v1435
    %v1438 = vshrl.u32 %v1356, 16
    %v1440 = vshll.u32 %v1356, 16
    %v1442 = vrot.slane %v1440, 1
    %v1443 = vor.u32 %v1438, %v1442
    %v1445 = vshrl.u32 %v1357, 16
    %v1447 = vshll.u32 %v1357, 16
    %v1449 = vrot.slane %v1447, 1
    %v1450 = vor.u32 %v1445, %v1449
    %v1452 = vshrl.u32 %v1358, 16
    %v1454 = vshll.u32 %v1358, 16
    %v1456 = vrot.slane %v1454, 1
    %v1457 = vor.u32 %v1452, %v1456
    %1458 = vrot.lane.b32.xlu0 %v390, 8
    %v1459 = vpop.permute.xlu0 %1458
    %1460 = vrot.lane.b32.xlu0 %v1366, 8
    %v1461 = vpop.permute.xlu0 %1460
    %1462 = vrot.lane.b32.xlu0 %v1373, 8
    %v1463 = vpop.permute.xlu0 %1462
    %1464 = vrot.lane.b32.xlu0 %v1380, 8
    %v1465 = vpop.permute.xlu0 %1464
    %1466 = vrot.lane.b32.xlu0 %v1387, 8
    %v1467 = vpop.permute.xlu0 %1466
    %1468 = vrot.lane.b32.xlu0 %v1394, 8
    %v1469 = vpop.permute.xlu0 %1468
    %1470 = vrot.lane.b32.xlu0 %v1401, 8
    %v1471 = vpop.permute.xlu0 %1470
    %1472 = vrot.lane.b32.xlu0 %v1408, 8
    %v1473 = vpop.permute.xlu0 %1472
    %1474 = vrot.lane.b32.xlu0 %v1415, 8
    %v1475 = vpop.permute.xlu0 %1474
    %1476 = vrot.lane.b32.xlu0 %v1422, 8
    %v1477 = vpop.permute.xlu0 %1476
    %1478 = vrot.lane.b32.xlu0 %v1429, 8
    %v1479 = vpop.permute.xlu0 %1478
    %1480 = vrot.lane.b32.xlu0 %v1436, 8
    %v1481 = vpop.permute.xlu0 %1480
    %1482 = vrot.lane.b32.xlu0 %v1443, 8
    %v1483 = vpop.permute.xlu0 %1482
    %1484 = vrot.lane.b32.xlu0 %v1450, 8
    %v1485 = vpop.permute.xlu0 %1484
    %1486 = vrot.lane.b32.xlu0 %v1457, 8
    %v1487 = vpop.permute.xlu0 %1486
    %v1502 = vrot.slane %v1344, 1
    %v1503 = vrot.slane %v1345, 1
    %v1504 = vrot.slane %v1346, 1
    %v1505 = vrot.slane %v1347, 1
    %v1506 = vrot.slane %v1348, 1
    %v1507 = vrot.slane %v1349, 1
    %v1508 = vrot.slane %v1350, 1
    %v1509 = vrot.slane %v1352, 1
    %v1510 = vrot.slane %v1353, 1
    %v1511 = vrot.slane %v1354, 1
    %v1512 = vrot.slane %v1355, 1
    %v1513 = vrot.slane %v1356, 1
    %v1514 = vrot.slane %v1357, 1
    %v1515 = vrot.slane %v1358, 1
    %1516 = vrot.lane.b32.xlu0 %v534, 16
    %v1517 = vpop.permute.xlu0 %1516
    %1518 = vrot.lane.b32.xlu0 %v1502, 16
    %v1519 = vpop.permute.xlu0 %1518
    %1520 = vrot.lane.b32.xlu0 %v1503, 16
    %v1521 = vpop.permute.xlu0 %1520
    %1522 = vrot.lane.b32.xlu0 %v1504, 16
    %v1523 = vpop.permute.xlu0 %1522
    %1524 = vrot.lane.b32.xlu0 %v1505, 16
    %v1525 = vpop.permute.xlu0 %1524
    %1526 = vrot.lane.b32.xlu0 %v1506, 16
    %v1527 = vpop.permute.xlu0 %1526
    %1528 = vrot.lane.b32.xlu0 %v1507, 16
    %v1529 = vpop.permute.xlu0 %1528
    %1530 = vrot.lane.b32.xlu0 %v1508, 16
    %v1531 = vpop.permute.xlu0 %1530
    %1532 = vrot.lane.b32.xlu0 %v1509, 16
    %v1533 = vpop.permute.xlu0 %1532
    %1534 = vrot.lane.b32.xlu0 %v1510, 16
    %v1535 = vpop.permute.xlu0 %1534
    %1536 = vrot.lane.b32.xlu0 %v1511, 16
    %v1537 = vpop.permute.xlu0 %1536
    %1538 = vrot.lane.b32.xlu0 %v1512, 16
    %v1539 = vpop.permute.xlu0 %1538
    %1540 = vrot.lane.b32.xlu0 %v1513, 16
    %v1541 = vpop.permute.xlu0 %1540
    %1542 = vrot.lane.b32.xlu0 %v1514, 16
    %v1543 = vpop.permute.xlu0 %1542
    %1544 = vrot.lane.b32.xlu0 %v1515, 16
    %v1545 = vpop.permute.xlu0 %1544
    %v1547 = vsel %vm610, 0, %v1459
    %v1549 = vsel %vm610, %v1344, %v1461
    %v1551 = vsel %vm610, %v1345, %v1463
    %v1553 = vsel %vm610, %v1346, %v1465
    %v1555 = vsel %vm610, %v1347, %v1467
    %v1557 = vsel %vm610, %v1348, %v1469
    %v1559 = vsel %vm610, %v1349, %v1471
    %v1561 = vsel %vm610, %v1350, %v1473
    %v1563 = vsel %vm610, %v1352, %v1475
    %v1565 = vsel %vm610, %v1353, %v1477
    %v1567 = vsel %vm610, %v1354, %v1479
    %v1569 = vsel %vm610, %v1355, %v1481
    %v1571 = vsel %vm610, %v1356, %v1483
    %v1573 = vsel %vm610, %v1357, %v1485
    %v1575 = vsel %vm610, %v1358, %v1487
    %vm1576 = vcmask 130048
    %v1578 = vsel %vm1576, %v1547, %v1517
    %v1580 = vsel %vm1576, %v1549, %v1519
    %v1582 = vsel %vm1576, %v1551, %v1521
    %v1584 = vsel %vm1576, %v1553, %v1523
    %v1586 = vsel %vm1576, %v1555, %v1525
    %v1588 = vsel %vm1576, %v1557, %v1527
    %v1590 = vsel %vm1576, %v1559, %v1529
    %v1592 = vsel %vm1576, %v1561, %v1531
    %v1594 = vsel %vm1576, %v1563, %v1533
    %v1596 = vsel %vm1576, %v1565, %v1535
    %v1598 = vsel %vm1576, %v1567, %v1537
    %v1600 = vsel %vm1576, %v1569, %v1539
    %v1602 = vsel %vm1576, %v1571, %v1541
    %v1604 = vsel %vm1576, %v1573, %v1543
    %v1606 = vsel %vm1576, %v1575, %v1545
    %v1607 = vld [vmem:[%s4] sm:$0xf]
    %v1608 = vld [vmem:[%s4 + $0x4] sm:$0xf]
    %v1609 = vld [vmem:[%s4 + $0x8] sm:$0xf]
    %v1611 = vshrl.u32 %v1351, 16
    %v1613 = vshll.u32 %v1351, 16
    %v1615 = vrot.slane %v1613, 1
    %v1616 = vor.u32 %v1611, %v1615
    %v1618 = vshrl.u32 %v1359, 16
    %v1620 = vshll.u32 %v1359, 16
    %v1622 = vrot.slane %v1620, 1
    %v1623 = vor.u32 %v1618, %v1622
    %1624 = vrot.lane.b32.xlu0 %v1616, 8
    %v1625 = vpop.permute.xlu0 %1624
    %1626 = vrot.lane.b32.xlu0 %v1623, 8
    %v1627 = vpop.permute.xlu0 %1626
    %v1630 = vrot.slane %v1351, 1
    %v1631 = vrot.slane %v1359, 1
    %1632 = vrot.lane.b32.xlu0 %v1630, 16
    %v1633 = vpop.permute.xlu0 %1632
    %1634 = vrot.lane.b32.xlu0 %v1631, 16
    %v1635 = vpop.permute.xlu0 %1634
    %v1637 = vsel %vm610, %v1351, %v1625
    %v1639 = vsel %vm610, %v1359, %v1627
    %v1641 = vsel %vm1576, %v1637, %v1633
    %v1643 = vsel %vm1576, %v1639, %v1635
    %s1644 = scalar_lea.vmem %s4, 12
    %v1645 = vld [vmem:[%s1644] sm:$0xf]
    %v1646 = vld [vmem:[%s1644 + $0x4] sm:$0xf]
    %v1647 = vld [vmem:[%s1644 + $0x8] sm:$0xf]
    %v1664 = vunpack.c.l.b16 %v1580
    %v1665 = vunpack.c.l.b16 %v1582
    %v1666 = vunpack.c.l.b16 %v1584
    %v1667 = vunpack.c.l.b16 %v1586
    %v1668 = vunpack.c.l.b16 %v1588
    %v1669 = vunpack.c.l.b16 %v1590
    %v1670 = vunpack.c.l.b16 %v1592
    %v1671 = vunpack.c.l.b16 %v1641
    %v1672 = vunpack.c.l.b16 %v1594
    %v1673 = vunpack.c.l.b16 %v1596
    %v1674 = vunpack.c.l.b16 %v1598
    %v1675 = vunpack.c.l.b16 %v1600
    %v1676 = vunpack.c.l.b16 %v1602
    %v1677 = vunpack.c.l.b16 %v1604
    %v1678 = vunpack.c.l.b16 %v1606
    %v1679 = vunpack.c.l.b16 %v1643
    %v1680 = vpack.c.b16 %v1665, %v1664
    %v1681 = vpack.c.b16 %v1667, %v1666
    %v1682 = vpack.c.b16 %v1669, %v1668
    %v1683 = vpack.c.b16 %v1671, %v1670
    %v1684 = vpack.c.b16 %v1673, %v1672
    %v1685 = vpack.c.b16 %v1675, %v1674
    %v1686 = vpack.c.b16 %v1677, %v1676
    %v1687 = vpack.c.b16 %v1679, %v1678
    %v1691 = vunpack.c.l.b16 %v1645
    %v1692 = vunpack.c.l.b16 %v1646
    %v1693 = vunpack.c.l.b16 %v1647
    %v1694 = vpack.c.b16 %v1692, %v1691
    %v1695 = vpack.c.b16 %v1693, %v1693
    %vm1697 = vcmask 195584
    %v1699 = vsel %vm1697, %v1680, 0
    %v1702 = vsel %vm1697, %v1681, 0
    %v1705 = vsel %vm1697, %v1682, 0
    %v1708 = vsel %vm1697, %v1683, 0
    %v1711 = vsel %vm1697, %v1684, 0
    %v1714 = vsel %vm1697, %v1685, 0
    %v1717 = vsel %vm1697, %v1686, 0
    %v1720 = vsel %vm1697, %v1687, 0
    %vm1722 = vcmask 1043456
    %v1724 = vsel %vm1722, %v1695, 0
    %1726 = vmatprep.subr.bf16.mxu0 0
    %1727 = vmatpush1.bf16.msra.mxu0 %v1694
    %1728 = vmatprep.subr.bf16.mxu0 0
    %1729 = vmatpush1.bf16.msra.mxu0 %v1724
    %1730 = vmatprep.subr.bf16.mxu0 0
    %1731 = vmatpush1.bf16.msra.mxu0 0
    %1732 = vmatprep.subr.bf16.mxu0 0
    %1733 = vmatpush1.bf16.msra.mxu0 0
    %1734 = vmatprep.subr.bf16.mxu0 0
    %1735 = vmatpush1.bf16.msra.mxu0 0
    %1736 = vmatprep.subr.bf16.mxu0 0
    %1737 = vmatpush1.bf16.msra.mxu0 0
    %1738 = vmatprep.subr.bf16.mxu0 0
    %1739 = vmatpush1.bf16.msra.mxu0 0
    %1740 = vmatprep.subr.bf16.mxu0 0
    %1741 = vmatpush1.bf16.msra.mxu0 0
    %1742 = vmatprep.subr.bf16.mxu0 0
    %1743 = vmatpush1.bf16.msra.mxu0 0
    %1744 = vmatprep.subr.bf16.mxu0 0
    %1745 = vmatpush1.bf16.msra.mxu0 0
    %1746 = vmatprep.subr.bf16.mxu0 0
    %1747 = vmatpush1.bf16.msra.mxu0 0
    %1748 = vmatprep.subr.bf16.mxu0 0
    %1749 = vmatpush1.bf16.msra.mxu0 0
    %1750 = vmatprep.subr.bf16.mxu0 0
    %1751 = vmatpush1.bf16.msra.mxu0 0
    %1752 = vmatprep.subr.bf16.mxu0 0
    %1753 = vmatpush1.bf16.msra.mxu0 0
    %1754 = vmatprep.subr.bf16.mxu0 0
    %1755 = vmatpush1.bf16.msra.mxu0 0
    %1756 = vmatprep.subr.bf16.mxu0 0
    %1757 = vmatpush1.bf16.msra.mxu0 0
    %1758 = vmatprep.mubr.bf16.mxu0 0
    %1759 = vmatmul.mubr.bf16.gmra.mrb[0].mxu0 %v1699
    %v1760 = vpop.f32.mrb[0].mxu0
    %v1761 = vadd.f32 0.0, %v1760
    %v1762 = vpop.f32.mrb[0].mxu0
    %v1763 = vpop.f32.mrb[0].mxu0
    %v1764 = vadd.f32 0.0, %v1763
    %v1765 = vpop.f32.mrb[0].mxu0
    %1766 = vmatprep.mubr.bf16.mxu0 0
    %1767 = vmatmul.mubr.bf16.gmra.mrb[0].mxu0 %v1702
    %v1768 = vpop.f32.mrb[0].mxu0
    %v1769 = vadd.f32 0.0, %v1768
    %v1770 = vpop.f32.mrb[0].mxu0
    %v1771 = vpop.f32.mrb[0].mxu0
    %v1772 = vadd.f32 0.0, %v1771
    %v1773 = vpop.f32.mrb[0].mxu0
    %1774 = vmatprep.mubr.bf16.mxu0 0
    %1775 = vmatmul.mubr.bf16.gmra.mrb[0].mxu0 %v1705
    %v1776 = vpop.f32.mrb[0].mxu0
    %v1777 = vadd.f32 0.0, %v1776
    %v1778 = vpop.f32.mrb[0].mxu0
    %v1779 = vpop.f32.mrb[0].mxu0
    %v1780 = vadd.f32 0.0, %v1779
    %v1781 = vpop.f32.mrb[0].mxu0
    %1782 = vmatprep.mubr.bf16.mxu0 0
    %1783 = vmatmul.mubr.bf16.gmra.mrb[0].mxu0 %v1708
    %v1784 = vpop.f32.mrb[0].mxu0
    %v1785 = vadd.f32 0.0, %v1784
    %v1786 = vpop.f32.mrb[0].mxu0
    %v1787 = vpop.f32.mrb[0].mxu0
    %v1788 = vadd.f32 0.0, %v1787
    %v1789 = vpop.f32.mrb[0].mxu0
    %1790 = vmatprep.mubr.bf16.mxu0 0
    %1791 = vmatmul.mubr.bf16.gmra.mrb[0].mxu0 %v1711
    %v1792 = vpop.f32.mrb[0].mxu0
    %v1793 = vadd.f32 0.0, %v1792
    %v1794 = vpop.f32.mrb[0].mxu0
    %v1795 = vpop.f32.mrb[0].mxu0
    %v1796 = vadd.f32 0.0, %v1795
    %v1797 = vpop.f32.mrb[0].mxu0
    %1798 = vmatprep.mubr.bf16.mxu0 0
    %1799 = vmatmul.mubr.bf16.gmra.mrb[0].mxu0 %v1714
    %v1800 = vpop.f32.mrb[0].mxu0
    %v1801 = vadd.f32 0.0, %v1800
    %v1802 = vpop.f32.mrb[0].mxu0
    %v1803 = vpop.f32.mrb[0].mxu0
    %v1804 = vadd.f32 0.0, %v1803
    %v1805 = vpop.f32.mrb[0].mxu0
    %1806 = vmatprep.mubr.bf16.mxu0 0
    %1807 = vmatmul.mubr.bf16.gmra.mrb[0].mxu0 %v1717
    %v1808 = vpop.f32.mrb[0].mxu0
    %v1809 = vadd.f32 0.0, %v1808
    %v1810 = vpop.f32.mrb[0].mxu0
    %v1811 = vpop.f32.mrb[0].mxu0
    %v1812 = vadd.f32 0.0, %v1811
    %v1813 = vpop.f32.mrb[0].mxu0
    %1814 = vmatprep.mubr.bf16.mxu0 0
    %1815 = vmatmul.mubr.bf16.gmra.mrb[0].mxu0 %v1720
    %v1816 = vpop.f32.mrb[0].mxu0
    %v1817 = vadd.f32 0.0, %v1816
    %v1818 = vpop.f32.mrb[0].mxu0
    %v1819 = vpop.f32.mrb[0].mxu0
    %v1820 = vadd.f32 0.0, %v1819
    %v1821 = vpop.f32.mrb[0].mxu0
    %1822 = vdwg.mxu0
    %v1824 = vunpack.c.l.b16 %v1578
    %v1825 = vpack.c.b16 %v1664, %v1824
    %v1826 = vpack.c.b16 %v1666, %v1665
    %v1827 = vpack.c.b16 %v1668, %v1667
    %v1828 = vpack.c.b16 %v1670, %v1669
    %v1829 = vpack.c.b16 %v1672, %v1824
    %v1830 = vpack.c.b16 %v1674, %v1673
    %v1831 = vpack.c.b16 %v1676, %v1675
    %v1832 = vpack.c.b16 %v1678, %v1677
    %v1836 = vunpack.c.l.b16 %v1607
    %v1837 = vunpack.c.l.b16 %v1608
    %v1838 = vunpack.c.l.b16 %v1609
    %v1839 = vpack.c.b16 %v1837, %v1836
    %v1840 = vpack.c.b16 %v1838, %v1838
    %v1843 = vsel %vm1697, %v1825, 0
    %v1846 = vsel %vm1697, %v1826, 0
    %v1849 = vsel %vm1697, %v1827, 0
    %v1852 = vsel %vm1697, %v1828, 0
    %v1855 = vsel %vm1697, %v1829, 0
    %v1858 = vsel %vm1697, %v1830, 0
    %v1861 = vsel %vm1697, %v1831, 0
    %v1864 = vsel %vm1697, %v1832, 0
    %v1867 = vsel %vm1722, %v1840, 0
    %1869 = vmatprep.subr.bf16.mxu0 0
    %1870 = vmatpush1.bf16.msra.mxu0 %v1839
    %1871 = vmatprep.subr.bf16.mxu0 0
    %1872 = vmatpush1.bf16.msra.mxu0 %v1867
    %1873 = vmatprep.subr.bf16.mxu0 0
    %1874 = vmatpush1.bf16.msra.mxu0 0
    %1875 = vmatprep.subr.bf16.mxu0 0
    %1876 = vmatpush1.bf16.msra.mxu0 0
    %1877 = vmatprep.subr.bf16.mxu0 0
    %1878 = vmatpush1.bf16.msra.mxu0 0
    %1879 = vmatprep.subr.bf16.mxu0 0
    %1880 = vmatpush1.bf16.msra.mxu0 0
    %1881 = vmatprep.subr.bf16.mxu0 0
    %1882 = vmatpush1.bf16.msra.mxu0 0
    %1883 = vmatprep.subr.bf16.mxu0 0
    %1884 = vmatpush1.bf16.msra.mxu0 0
    %1885 = vmatprep.subr.bf16.mxu0 0
    %1886 = vmatpush1.bf16.msra.mxu0 0
    %1887 = vmatprep.subr.bf16.mxu0 0
    %1888 = vmatpush1.bf16.msra.mxu0 0
    %1889 = vmatprep.subr.bf16.mxu0 0
    %1890 = vmatpush1.bf16.msra.mxu0 0
    %1891 = vmatprep.subr.bf16.mxu0 0
    %1892 = vmatpush1.bf16.msra.mxu0 0
    %1893 = vmatprep.subr.bf16.mxu0 0
    %1894 = vmatpush1.bf16.msra.mxu0 0
    %1895 = vmatprep.subr.bf16.mxu0 0
    %1896 = vmatpush1.bf16.msra.mxu0 0
    %1897 = vmatprep.subr.bf16.mxu0 0
    %1898 = vmatpush1.bf16.msra.mxu0 0
    %1899 = vmatprep.subr.bf16.mxu0 0
    %1900 = vmatpush1.bf16.msra.mxu0 0
    %1901 = vmatprep.mubr.bf16.mxu0 0
    %1902 = vmatmul.mubr.bf16.gmra.mrb[0].mxu0 %v1843
    %v1903 = vpop.f32.mrb[0].mxu0
    %v1904 = vadd.f32 %v1761, %v1903
    %v1905 = vpop.f32.mrb[0].mxu0
    %v1906 = vpop.f32.mrb[0].mxu0
    %v1907 = vadd.f32 %v1764, %v1906
    %v1908 = vpop.f32.mrb[0].mxu0
    %1909 = vmatprep.mubr.bf16.mxu0 0
    %1910 = vmatmul.mubr.bf16.gmra.mrb[0].mxu0 %v1846
    %v1911 = vpop.f32.mrb[0].mxu0
    %v1912 = vadd.f32 %v1769, %v1911
    %v1913 = vpop.f32.mrb[0].mxu0
    %v1914 = vpop.f32.mrb[0].mxu0
    %v1915 = vadd.f32 %v1772, %v1914
    %v1916 = vpop.f32.mrb[0].mxu0
    %1917 = vmatprep.mubr.bf16.mxu0 0
    %1918 = vmatmul.mubr.bf16.gmra.mrb[0].mxu0 %v1849
    %v1919 = vpop.f32.mrb[0].mxu0
    %v1920 = vadd.f32 %v1777, %v1919
    %v1921 = vpop.f32.mrb[0].mxu0
    %v1922 = vpop.f32.mrb[0].mxu0
    %v1923 = vadd.f32 %v1780, %v1922
    %v1924 = vpop.f32.mrb[0].mxu0
    %1925 = vmatprep.mubr.bf16.mxu0 0
    %1926 = vmatmul.mubr.bf16.gmra.mrb[0].mxu0 %v1852
    %v1927 = vpop.f32.mrb[0].mxu0
    %v1928 = vadd.f32 %v1785, %v1927
    %v1929 = vpop.f32.mrb[0].mxu0
    %v1930 = vpop.f32.mrb[0].mxu0
    %v1931 = vadd.f32 %v1788, %v1930
    %v1932 = vpop.f32.mrb[0].mxu0
    %1933 = vmatprep.mubr.bf16.mxu0 0
    %1934 = vmatmul.mubr.bf16.gmra.mrb[0].mxu0 %v1855
    %v1935 = vpop.f32.mrb[0].mxu0
    %v1936 = vadd.f32 %v1793, %v1935
    %v1937 = vpop.f32.mrb[0].mxu0
    %v1938 = vpop.f32.mrb[0].mxu0
    %v1939 = vadd.f32 %v1796, %v1938
    %v1940 = vpop.f32.mrb[0].mxu0
    %1941 = vmatprep.mubr.bf16.mxu0 0
    %1942 = vmatmul.mubr.bf16.gmra.mrb[0].mxu0 %v1858
    %v1943 = vpop.f32.mrb[0].mxu0
    %v1944 = vadd.f32 %v1801, %v1943
    %v1945 = vpop.f32.mrb[0].mxu0
    %v1946 = vpop.f32.mrb[0].mxu0
    %v1947 = vadd.f32 %v1804, %v1946
    %v1948 = vpop.f32.mrb[0].mxu0
    %1949 = vmatprep.mubr.bf16.mxu0 0
    %1950 = vmatmul.mubr.bf16.gmra.mrb[0].mxu0 %v1861
    %v1951 = vpop.f32.mrb[0].mxu0
    %v1952 = vadd.f32 %v1809, %v1951
    %v1953 = vpop.f32.mrb[0].mxu0
    %v1954 = vpop.f32.mrb[0].mxu0
    %v1955 = vadd.f32 %v1812, %v1954
    %v1956 = vpop.f32.mrb[0].mxu0
    %1957 = vmatprep.mubr.bf16.mxu0 0
    %1958 = vmatmul.mubr.bf16.gmra.mrb[0].mxu0 %v1864
    %v1959 = vpop.f32.mrb[0].mxu0
    %v1960 = vadd.f32 %v1817, %v1959
    %v1961 = vpop.f32.mrb[0].mxu0
    %v1962 = vpop.f32.mrb[0].mxu0
    %v1963 = vadd.f32 %v1820, %v1962
    %v1964 = vpop.f32.mrb[0].mxu0
    %1965 = vdwg.mxu0
    %s1966 = scalar_lea.vmem %s4, 24
    %v1967 = vld [vmem:[%s1966] sm:$0xf]
    %v1968 = vld [vmem:[%s1966 + $0x4] sm:$0xf]
    %v1969 = vld [vmem:[%s1966 + $0x8] sm:$0xf]
    %v1970 = vpack.c.b16 %v1824, %v1671
    %v1971 = vpack.c.b16 %v1824, %v1679
    %v1975 = vunpack.c.l.b16 %v1967
    %v1976 = vunpack.c.l.b16 %v1968
    %v1977 = vunpack.c.l.b16 %v1969
    %v1978 = vpack.c.b16 %v1976, %v1975
    %v1979 = vpack.c.b16 %v1977, %v1977
    %v1982 = vsel %vm1697, %v1970, 0
    %v1985 = vsel %vm1697, %v1971, 0
    %v1988 = vsel %vm1722, %v1979, 0
    %1990 = vmatprep.subr.bf16.mxu0 0
    %1991 = vmatpush1.bf16.msra.mxu0 %v1978
    %1992 = vmatprep.subr.bf16.mxu0 0
    %1993 = vmatpush1.bf16.msra.mxu0 %v1988
    %1994 = vmatprep.subr.bf16.mxu0 0
    %1995 = vmatpush1.bf16.msra.mxu0 0
    %1996 = vmatprep.subr.bf16.mxu0 0
    %1997 = vmatpush1.bf16.msra.mxu0 0
    %1998 = vmatprep.subr.bf16.mxu0 0
    %1999 = vmatpush1.bf16.msra.mxu0 0
    %2000 = vmatprep.subr.bf16.mxu0 0
    %2001 = vmatpush1.bf16.msra.mxu0 0
    %2002 = vmatprep.subr.bf16.mxu0 0
    %2003 = vmatpush1.bf16.msra.mxu0 0
    %2004 = vmatprep.subr.bf16.mxu0 0
    %2005 = vmatpush1.bf16.msra.mxu0 0
    %2006 = vmatprep.subr.bf16.mxu0 0
    %2007 = vmatpush1.bf16.msra.mxu0 0
    %2008 = vmatprep.subr.bf16.mxu0 0
    %2009 = vmatpush1.bf16.msra.mxu0 0
    %2010 = vmatprep.subr.bf16.mxu0 0
    %2011 = vmatpush1.bf16.msra.mxu0 0
    %2012 = vmatprep.subr.bf16.mxu0 0
    %2013 = vmatpush1.bf16.msra.mxu0 0
    %2014 = vmatprep.subr.bf16.mxu0 0
    %2015 = vmatpush1.bf16.msra.mxu0 0
    %2016 = vmatprep.subr.bf16.mxu0 0
    %2017 = vmatpush1.bf16.msra.mxu0 0
    %2018 = vmatprep.subr.bf16.mxu0 0
    %2019 = vmatpush1.bf16.msra.mxu0 0
    %2020 = vmatprep.subr.bf16.mxu0 0
    %2021 = vmatpush1.bf16.msra.mxu0 0
    %2022 = vmatprep.mubr.bf16.mxu0 0
    %2023 = vmatmul.mubr.bf16.gmra.mrb[0].mxu0 %v1846
    %v2024 = vpop.f32.mrb[0].mxu0
    %v2025 = vadd.f32 0.0, %v2024
    %v2026 = vpop.f32.mrb[0].mxu0
    %v2027 = vpop.f32.mrb[0].mxu0
    %v2028 = vadd.f32 0.0, %v2027
    %v2029 = vpop.f32.mrb[0].mxu0
    %2030 = vmatprep.mubr.bf16.mxu0 0
    %2031 = vmatmul.mubr.bf16.gmra.mrb[0].mxu0 %v1849
    %v2032 = vpop.f32.mrb[0].mxu0
    %v2033 = vadd.f32 0.0, %v2032
    %v2034 = vpop.f32.mrb[0].mxu0
    %v2035 = vpop.f32.mrb[0].mxu0
    %v2036 = vadd.f32 0.0, %v2035
    %v2037 = vpop.f32.mrb[0].mxu0
    %2038 = vmatprep.mubr.bf16.mxu0 0
    %2039 = vmatmul.mubr.bf16.gmra.mrb[0].mxu0 %v1852
    %v2040 = vpop.f32.mrb[0].mxu0
    %v2041 = vadd.f32 0.0, %v2040
    %v2042 = vpop.f32.mrb[0].mxu0
    %v2043 = vpop.f32.mrb[0].mxu0
    %v2044 = vadd.f32 0.0, %v2043
    %v2045 = vpop.f32.mrb[0].mxu0
    %2046 = vmatprep.mubr.bf16.mxu0 0
    %2047 = vmatmul.mubr.bf16.gmra.mrb[0].mxu0 %v1982
    %v2048 = vpop.f32.mrb[0].mxu0
    %v2049 = vadd.f32 0.0, %v2048
    %v2050 = vpop.f32.mrb[0].mxu0
    %v2051 = vpop.f32.mrb[0].mxu0
    %v2052 = vadd.f32 0.0, %v2051
    %v2053 = vpop.f32.mrb[0].mxu0
    %2054 = vmatprep.mubr.bf16.mxu0 0
    %2055 = vmatmul.mubr.bf16.gmra.mrb[0].mxu0 %v1858
    %v2056 = vpop.f32.mrb[0].mxu0
    %v2057 = vadd.f32 0.0, %v2056
    %v2058 = vpop.f32.mrb[0].mxu0
    %v2059 = vpop.f32.mrb[0].mxu0
    %v2060 = vadd.f32 0.0, %v2059
    %v2061 = vpop.f32.mrb[0].mxu0
    %2062 = vmatprep.mubr.bf16.mxu0 0
    %2063 = vmatmul.mubr.bf16.gmra.mrb[0].mxu0 %v1861
    %v2064 = vpop.f32.mrb[0].mxu0
    %v2065 = vadd.f32 0.0, %v2064
    %v2066 = vpop.f32.mrb[0].mxu0
    %v2067 = vpop.f32.mrb[0].mxu0
    %v2068 = vadd.f32 0.0, %v2067
    %v2069 = vpop.f32.mrb[0].mxu0
    %2070 = vmatprep.mubr.bf16.mxu0 0
    %2071 = vmatmul.mubr.bf16.gmra.mrb[0].mxu0 %v1864
    %v2072 = vpop.f32.mrb[0].mxu0
    %v2073 = vadd.f32 0.0, %v2072
    %v2074 = vpop.f32.mrb[0].mxu0
    %v2075 = vpop.f32.mrb[0].mxu0
    %v2076 = vadd.f32 0.0, %v2075
    %v2077 = vpop.f32.mrb[0].mxu0
    %2078 = vmatprep.mubr.bf16.mxu0 0
    %2079 = vmatmul.mubr.bf16.gmra.mrb[0].mxu0 %v1985
    %v2080 = vpop.f32.mrb[0].mxu0
    %v2081 = vadd.f32 0.0, %v2080
    %v2082 = vpop.f32.mrb[0].mxu0
    %v2083 = vpop.f32.mrb[0].mxu0
    %v2084 = vadd.f32 0.0, %v2083
    %v2085 = vpop.f32.mrb[0].mxu0
    %2086 = vdwg.mxu0
    %v2087 = vadd.f32 %v1904, %v2025
    %v2088 = vadd.f32 %v1907, %v2028
    %v2089 = vadd.f32 %v1912, %v2033
    %v2090 = vadd.f32 %v1915, %v2036
    %v2091 = vadd.f32 %v1920, %v2041
    %v2092 = vadd.f32 %v1923, %v2044
    %v2093 = vadd.f32 %v1928, %v2049
    %v2094 = vadd.f32 %v1931, %v2052
    %v2095 = vadd.f32 %v1936, %v2057
    %v2096 = vadd.f32 %v1939, %v2060
    %v2097 = vadd.f32 %v1944, %v2065
    %v2098 = vadd.f32 %v1947, %v2068
    %v2099 = vadd.f32 %v1952, %v2073
    %v2100 = vadd.f32 %v1955, %v2076
    %v2101 = vadd.f32 %v1960, %v2081
    %v2102 = vadd.f32 %v1963, %v2084
    %v2103 = vld [vmem:[%s5] sm:$0x1]
    %v2105 = vlaneseq
    %v2106 = vshrl.u32 %v2105, 7
    %v2107 = vsub.s32 0, %v2106
    %v2108 = vrot.slane %v2103, %v2107
    %v2110 = vmul.f32 %v2087, %v2108
    %v2111 = vmul.f32 %v2088, %v2108
    %v2112 = vmul.f32 %v2089, %v2108
    %v2113 = vmul.f32 %v2090, %v2108
    %v2114 = vmul.f32 %v2091, %v2108
    %v2115 = vmul.f32 %v2092, %v2108
    %v2116 = vmul.f32 %v2093, %v2108
    %v2117 = vmul.f32 %v2094, %v2108
    %v2118 = vmul.f32 %v2095, %v2108
    %v2119 = vmul.f32 %v2096, %v2108
    %v2120 = vmul.f32 %v2097, %v2108
    %v2121 = vmul.f32 %v2098, %v2108
    %v2122 = vmul.f32 %v2099, %v2108
    %v2123 = vmul.f32 %v2100, %v2108
    %v2124 = vmul.f32 %v2101, %v2108
    %v2125 = vmul.f32 %v2102, %v2108
    %v2126 = vld [vmem:[%s6] sm:$0x1]
    %v2128 = vlaneseq
    %v2129 = vshrl.u32 %v2128, 7
    %v2130 = vsub.s32 0, %v2129
    %v2131 = vrot.slane %v2126, %v2130
    %v2133 = vadd.f32 %v2110, %v2131
    %v2134 = vadd.f32 %v2111, %v2131
    %v2135 = vadd.f32 %v2112, %v2131
    %v2136 = vadd.f32 %v2113, %v2131
    %v2137 = vadd.f32 %v2114, %v2131
    %v2138 = vadd.f32 %v2115, %v2131
    %v2139 = vadd.f32 %v2116, %v2131
    %v2140 = vadd.f32 %v2117, %v2131
    %v2141 = vadd.f32 %v2118, %v2131
    %v2142 = vadd.f32 %v2119, %v2131
    %v2143 = vadd.f32 %v2120, %v2131
    %v2144 = vadd.f32 %v2121, %v2131
    %v2145 = vadd.f32 %v2122, %v2131
    %v2146 = vadd.f32 %v2123, %v2131
    %v2147 = vadd.f32 %v2124, %v2131
    %v2148 = vadd.f32 %v2125, %v2131
    %v2149 = vmax.f32 %v2133, 0.0
    %v2150 = vmax.f32 %v2134, 0.0
    %v2151 = vmax.f32 %v2135, 0.0
    %v2152 = vmax.f32 %v2136, 0.0
    %v2153 = vmax.f32 %v2137, 0.0
    %v2154 = vmax.f32 %v2138, 0.0
    %v2155 = vmax.f32 %v2139, 0.0
    %v2156 = vmax.f32 %v2140, 0.0
    %v2157 = vmax.f32 %v2141, 0.0
    %v2158 = vmax.f32 %v2142, 0.0
    %v2159 = vmax.f32 %v2143, 0.0
    %v2160 = vmax.f32 %v2144, 0.0
    %v2161 = vmax.f32 %v2145, 0.0
    %v2162 = vmax.f32 %v2146, 0.0
    %v2163 = vmax.f32 %v2147, 0.0
    %v2164 = vmax.f32 %v2148, 0.0
    %2165 = vst.msk [vmem:[#allocation5] sm:$0xff] %vm610, %v2149
    %2166 = vst.msk [vmem:[#allocation5 + $0x8] sm:$0xff] %vm610, %v2150
    %2167 = vst.msk [vmem:[#allocation5 + $0x10] sm:$0xff] %vm610, %v2151
    %2168 = vst.msk [vmem:[#allocation5 + $0x18] sm:$0xff] %vm610, %v2152
    %2169 = vst.msk [vmem:[#allocation5 + $0x20] sm:$0xff] %vm610, %v2153
    %2170 = vst.msk [vmem:[#allocation5 + $0x28] sm:$0xff] %vm610, %v2154
    %2171 = vst.msk [vmem:[#allocation5 + $0x30] sm:$0xff] %vm610, %v2155
    %2172 = vst.msk [vmem:[#allocation5 + $0x38] sm:$0xff] %vm610, %v2156
    %2173 = vst.msk [vmem:[#allocation5 + $0x40] sm:$0xff] %vm610, %v2157
    %2174 = vst.msk [vmem:[#allocation5 + $0x48] sm:$0xff] %vm610, %v2158
    %2175 = vst.msk [vmem:[#allocation5 + $0x50] sm:$0xff] %vm610, %v2159
    %2176 = vst.msk [vmem:[#allocation5 + $0x58] sm:$0xff] %vm610, %v2160
    %2177 = vst.msk [vmem:[#allocation5 + $0x60] sm:$0xff] %vm610, %v2161
    %2178 = vst.msk [vmem:[#allocation5 + $0x68] sm:$0xff] %vm610, %v2162
    %2179 = vst.msk [vmem:[#allocation5 + $0x70] sm:$0xff] %vm610, %v2163
    %2180 = vst.msk [vmem:[#allocation5 + $0x78] sm:$0xff] %vm610, %v2164
    // Predicated region
    $region34: #{tpu_custom_call.1} parent=1 // pred_check
      _
    $region35: #{tpu_custom_call.1} parent=1 // pred_check_branch
      %2182 = sbr.rel (0) target = $region37
    $region36: #{tpu_custom_call.1} parent=1 // pred_region
      %s2184 = ssub.s32 2048, 2048
      %2185 = vsyncadd [#allocation4], %s2184
      %s2186 = sshll.u32 [#allocation5], 4
      %s2187 = int_to_ptr.vmem [resolvable:$true] %s2186
      %2192 = dma.vmem_to_hbm [thread:$0]  %s2187, 2048, %s7, [#allocation4], 128, 128, 8
    $region37: #{tpu_custom_call.1} parent=1 // pred_fallthru
      _
    // Predicated region
    $region38: #{tpu_custom_call.1} parent=1 // pred_check
      _
    $region39: #{tpu_custom_call.1} parent=1 // pred_check_branch
      %2194 = sbr.rel (0) target = $region41
    $region40: #{tpu_custom_call.1} parent=1 // pred_region
      %2195 = dma.done [#allocation4], 2048
    $region41: #{tpu_custom_call.1} parent=1 // pred_fallthru
      _
    %2196 = vsyncpa [#allocation3], 1
    %2197 = vsyncpa [#allocation4], 1

</llo_original>
